<compile_context>
chip_gen: v6e
topology: v6e:2x2x1
jax: 0.10.0
libtpu: 0.0.40
codegen_flags: <defaults>
</compile_context>

<pallas_src>
import functools

import jax
import jax.numpy as jnp
from jax.experimental import pallas as pl
from jax.experimental.pallas import tpu as pltpu

LEAKY_SLOPE = 0.01  # F.leaky_relu default negative_slope
LANE = 128


def _leaky_relu(h):
    # With bf16 `h` the slope constant weak-types to bf16 (v6e/v7x fast path);
    # with f32 `h` it stays f32 (v5e path).  Used by kernel and references so
    # numerics match exactly.
    return jnp.where(h > 0, h, LEAKY_SLOPE * h)


def _round_up(x, m):
    return (x + m - 1) // m * m


def _device_kind():
    try:
        return jax.devices()[0].device_kind.lower()
    except Exception:
        return ""


def _default_act_dtype():
    # v5e has no bf16 VALU path -> keep the epilogue in f32 there.
    return jnp.float32 if "v5" in _device_kind() else jnp.bfloat16


def _has_two_tensorcores():
    # v7x exposes 2 TensorCores per device; v5e/v6e are single-TC.
    k = _device_kind()
    return ("7" in k) and ("v5" not in k) and ("v6" not in k)


# -----------------------------------------------------------------------------
# Kernel: full AE forward for one batch tile (7 matmuls after en4/de1 folding).
# -----------------------------------------------------------------------------
def ae_kernel(x_ref,
              w1, b1, w2, b2, w3, b3, w45, b45, w6, b6, w7, b7, w8, b8,
              out_ref, *, act_dtype):
    def act_layer(h, w_ref, b_ref):
        # bf16 operands -> MXU peak rate; accumulate + bias-add in f32.
        a = jnp.dot(h, w_ref[...], preferred_element_type=jnp.float32) + b_ref[...]
        a = _leaky_relu(a.astype(act_dtype))
        return a.astype(jnp.bfloat16)

    # Per-tile bf16 cast of the input happens here (free vs a wrapper HBM pass).
    h = x_ref[...].astype(jnp.bfloat16)          # (tile, n_features)
    h = act_layer(h, w1, b1)                     # en1      -> 256 (200 + pad)
    h = act_layer(h, w2, b2)                     # en2      -> 128 (100 + pad)
    h = act_layer(h, w3, b3)                     # en3      -> 128 ( 50 + pad)
    # en4 (no activation) folded with de1:  h @ (W4 W5) + (b4 W5 + b5)
    h = act_layer(h, w45, b45)                   # en4+de1  -> 128 ( 50 + pad)
    h = act_layer(h, w6, b6)                     # de2      -> 128 (100 + pad)
    h = act_layer(h, w7, b7)                     # de3      -> 256 (200 + pad)
    out = jnp.dot(h, w8[...], preferred_element_type=jnp.float32) + b8[...]
    out_ref[...] = out.astype(out_ref.dtype)     # de4      -> n_features


# -----------------------------------------------------------------------------
# Parameters
# -----------------------------------------------------------------------------
def init_ae_params(key, n_features, z_dim, dtype=jnp.float32):
    """Deterministic init (PyTorch-style).  Weights (in, out); biases (1, out)."""
    dims = [n_features, 200, 100, 50, z_dim, 50, 100, 200, n_features]
    params = []
    for i in range(8):
        key, kw, kb = jax.random.split(key, 3)
        fan_in, fan_out = dims[i], dims[i + 1]
        bound = 1.0 / jnp.sqrt(jnp.asarray(fan_in, dtype))
        w = jax.random.uniform(kw, (fan_in, fan_out), dtype, -bound, bound)
        b = jax.random.uniform(kb, (1, fan_out), dtype, -bound, bound)
        params.append((w, b))
    return params


def prepare_params(params):
    """Fold en4+de1, zero-pad hidden dims to multiples of 128, cast weights bf16.

    The first layer's K dim and the last layer's N dim stay at n_features so the
    wrapper never has to pad/slice activations through HBM.  Zero padding is
    numerically inert: padded weight rows/cols and bias lanes are 0 and
    leaky_relu(0) == 0.
    """
    (w1, b1), (w2, b2), (w3, b3), (w4, b4), (w5, b5), (w6, b6), (w7, b7), (w8, b8) = params
    # en4 has no activation, so folding en4 and de1 is exact (done in f32).
    w45 = jnp.dot(w4.astype(jnp.float32), w5.astype(jnp.float32))
    b45 = jnp.dot(b4.astype(jnp.float32), w5.astype(jnp.float32)) + b5.astype(jnp.float32)
    layers = [(w1, b1), (w2, b2), (w3, b3), (w45, b45), (w6, b6), (w7, b7), (w8, b8)]
    prepared = []
    n_layers = len(layers)
    for idx, (w, b) in enumerate(layers):
        fi, fo = w.shape
        fip = fi if idx == 0 else _round_up(fi, LANE)
        fop = fo if idx == n_layers - 1 else _round_up(fo, LANE)
        wp = jnp.zeros((fip, fop), jnp.float32).at[:fi, :fo].set(w.astype(jnp.float32))
        bp = jnp.zeros((1, fop), jnp.float32).at[:, :fo].set(b.astype(jnp.float32))
        prepared.append((wp.astype(jnp.bfloat16), bp))   # bf16 weights, f32 biases
    return tuple(prepared)


# -----------------------------------------------------------------------------
# Wrapper
# -----------------------------------------------------------------------------
def _choose_batch_tile(batch, two_tc):
    """Biggest tile that fits comfortably; split only when it pays off.

    Per-tile VMEM is tiny (weights ~0.4 MiB bf16; a 2048-row tile of padded
    intermediates is a few MiB), so the tile is capped at 2048 rows purely to
    keep multi-step pipelining for huge batches.  Single-TC chips (v5e/v6e) get
    one step whenever the batch fits; v7x splits large batches into an even
    number of steps so dimension_semantics=("parallel",) feeds both TCs.
    """
    b8 = _round_up(max(batch, 8), 8)
    cap = 2048
    if b8 <= cap:
        if two_tc and b8 >= 1024:
            return _round_up((b8 + 1) // 2, 8)   # 2 even steps for the megacore
        return b8                                 # single step elsewhere
    return 1024 if two_tc else 2048


@functools.partial(jax.jit, static_argnames=("batch_tile", "act_dtype", "out_dtype"))
def _ae_forward_impl(x, prepared, *, batch_tile, act_dtype, out_dtype):
    batch, n_features = x.shape
    b_pad = _round_up(batch, batch_tile)
    grid = b_pad // batch_tile

    # Only the (rare) row remainder is padded; no feature-lane pad, no cast pass.
    if b_pad != batch:
        x = jnp.pad(x, ((0, b_pad - batch), (0, 0)))

    flat_params = [a for wb in prepared for a in wb]

    # Block last dims equal the full array dims (n_features / param widths), so
    # the (8,128) constraint is satisfied without any wrapper-side padding.
    x_spec = pl.BlockSpec((batch_tile, n_features), lambda i: (i, 0))
    # Grid-invariant whole-array blocks: weights stay resident across the grid.
    param_specs = [pl.BlockSpec(p.shape, lambda i: (0, 0)) for p in flat_params]
    out_spec = pl.BlockSpec((batch_tile, n_features), lambda i: (i, 0))

    flops = 2 * int(b_pad) * sum(int(w.size) for w, _ in prepared)
    bytes_accessed = (int(b_pad) * int(n_features) * (4 + jnp.dtype(out_dtype).itemsize)
                      + sum(int(w.size) * 2 + int(b.size) * 4 for w, b in prepared))

    out = pl.pallas_call(
        functools.partial(ae_kernel, act_dtype=act_dtype),
        out_shape=jax.ShapeDtypeStruct((b_pad, n_features), out_dtype),
        grid_spec=pltpu.PrefetchScalarGridSpec(
            num_scalar_prefetch=0,
            grid=(grid,),
            in_specs=[x_spec] + param_specs,
            out_specs=out_spec,
        ),
        compiler_params=pltpu.CompilerParams(
            dimension_semantics=("parallel",),
        ),
        cost_estimate=pl.CostEstimate(
            flops=flops, transcendentals=0, bytes_accessed=bytes_accessed),
    )(x, *flat_params)

    if b_pad != batch:
        out = out[:batch]
    return out


def ae_forward(x, prepared, batch_tile=None, act_dtype=None, out_dtype=jnp.float32):
    if batch_tile is None:
        batch_tile = _choose_batch_tile(x.shape[0], _has_two_tensorcores())
    if act_dtype is None:
        act_dtype = _default_act_dtype()
    return _ae_forward_impl(x, prepared, batch_tile=batch_tile,
                            act_dtype=act_dtype, out_dtype=out_dtype)


# -----------------------------------------------------------------------------
# References
# -----------------------------------------------------------------------------
def ae_reference_f32(x, params):
    """Pure-JAX reference of the PyTorch forward (f32 stand-in for f64 spec)."""
    h = x.astype(jnp.float32)
    for i, (w, b) in enumerate(params):
        h = h @ w.astype(jnp.float32) + b.astype(jnp.float32)
        if i not in (3, 7):          # no activation after en4 (z) and de4 (output)
            h = _leaky_relu(h)
    return h


def ae_reference_prepared(x, prepared, act_dtype):
    """Reference matching the kernel's exact numerics (fold, pad, bf16 dots)."""
    h = x.astype(jnp.bfloat16)
    n_layers = len(prepared)
    for i, (w, b) in enumerate(prepared):
        a = jnp.dot(h, w, preferred_element_type=jnp.float32) + b
        if i == n_layers - 1:
            return a
        h = _leaky_relu(a.astype(act_dtype)).astype(jnp.bfloat16)


if __name__ == "__main__":
    n_features = 32
    z_dim = 8
    batch = 256     # small demo; fits in a single batch tile on 1-TC chips

    key = jax.random.PRNGKey(0)
    key, kx = jax.random.split(key)
    x = jax.random.normal(kx, (batch, n_features), jnp.float32)
    params = init_ae_params(key, n_features, z_dim)
    prepared = prepare_params(params)

    out = ae_forward(x, prepared)
    out = jax.block_until_ready(out)
    assert out.shape == (batch, n_features)

    # Tight check: same fold / bf16-matmul / f32-accumulate / epilogue recipe.
    act_dtype = _default_act_dtype()
    ref_match = ae_reference_prepared(x, prepared, act_dtype)
    assert jnp.allclose(out, ref_match, atol=5e-3, rtol=5e-3), \
        "mismatch vs matched reference"

    # Semantics sanity check vs the (f32) spec reference: only bf16 drift allowed.
    ref_f32 = ae_reference_f32(x, params)
    max_err = float(jnp.max(jnp.abs(out - ref_f32)))
    assert max_err < 0.1, f"bf16 drift too large vs f32 reference: {max_err}"

    print("KERNEL_OK")
</pallas_src>

<mosaic_0001>
module attributes {stable_mosaic.version = 11 : i64} {
  func.func @ae_kernel(%arg0: i32, %arg1: memref<256x32xf32, #tpu.memory_space<vmem>>, %arg2: memref<32x256xbf16, #tpu.memory_space<vmem>>, %arg3: memref<1x256xf32, #tpu.memory_space<vmem>>, %arg4: memref<256x128xbf16, #tpu.memory_space<vmem>>, %arg5: memref<1x128xf32, #tpu.memory_space<vmem>>, %arg6: memref<128x128xbf16, #tpu.memory_space<vmem>>, %arg7: memref<1x128xf32, #tpu.memory_space<vmem>>, %arg8: memref<128x128xbf16, #tpu.memory_space<vmem>>, %arg9: memref<1x128xf32, #tpu.memory_space<vmem>>, %arg10: memref<128x128xbf16, #tpu.memory_space<vmem>>, %arg11: memref<1x128xf32, #tpu.memory_space<vmem>>, %arg12: memref<128x256xbf16, #tpu.memory_space<vmem>>, %arg13: memref<1x256xf32, #tpu.memory_space<vmem>>, %arg14: memref<256x32xbf16, #tpu.memory_space<vmem>>, %arg15: memref<1x32xf32, #tpu.memory_space<vmem>>, %arg16: memref<256x32xf32, #tpu.memory_space<vmem>>) attributes {dimension_semantics = [#tpu.dimension_semantics<parallel>], iteration_bounds = array<i64: 1>, scalar_prefetch = 0 : i64, scratch_operands = 0 : i64, tpu.core_type = #tpu.core_type<tc>, window_params = [{transform_indices = @transform_0, window_bounds = array<i64: 256, 32>}, {pipeline_mode = #tpu.pipeline_mode<synchronous>, transform_indices = @transform_1, window_bounds = array<i64: 32, 256>}, {pipeline_mode = #tpu.pipeline_mode<synchronous>, transform_indices = @transform_2, window_bounds = array<i64: 1, 256>}, {pipeline_mode = #tpu.pipeline_mode<synchronous>, transform_indices = @transform_3, window_bounds = array<i64: 256, 128>}, {pipeline_mode = #tpu.pipeline_mode<synchronous>, transform_indices = @transform_4, window_bounds = array<i64: 1, 128>}, {pipeline_mode = #tpu.pipeline_mode<synchronous>, transform_indices = @transform_5, window_bounds = array<i64: 128, 128>}, {pipeline_mode = #tpu.pipeline_mode<synchronous>, transform_indices = @transform_6, window_bounds = array<i64: 1, 128>}, {pipeline_mode = #tpu.pipeline_mode<synchronous>, transform_indices = @transform_7, window_bounds = array<i64: 128, 128>}, {pipeline_mode = #tpu.pipeline_mode<synchronous>, transform_indices = @transform_8, window_bounds = array<i64: 1, 128>}, {pipeline_mode = #tpu.pipeline_mode<synchronous>, transform_indices = @transform_9, window_bounds = array<i64: 128, 128>}, {pipeline_mode = #tpu.pipeline_mode<synchronous>, transform_indices = @transform_10, window_bounds = array<i64: 1, 128>}, {pipeline_mode = #tpu.pipeline_mode<synchronous>, transform_indices = @transform_11, window_bounds = array<i64: 128, 256>}, {pipeline_mode = #tpu.pipeline_mode<synchronous>, transform_indices = @transform_12, window_bounds = array<i64: 1, 256>}, {pipeline_mode = #tpu.pipeline_mode<synchronous>, transform_indices = @transform_13, window_bounds = array<i64: 256, 32>}, {pipeline_mode = #tpu.pipeline_mode<synchronous>, transform_indices = @transform_14, window_bounds = array<i64: 1, 32>}, {transform_indices = @transform_15, window_bounds = array<i64: 256, 32>}]} {
    %c0 = arith.constant 0 : index
    %c0_0 = arith.constant 0 : index
    %0 = vector.load %arg1[%c0, %c0_0] : memref<256x32xf32, #tpu.memory_space<vmem>>, vector<256x32xf32>
    %1 = arith.truncf %0 : vector<256x32xf32> to vector<256x32xbf16>
    %c0_1 = arith.constant 0 : index
    %c0_2 = arith.constant 0 : index
    %2 = vector.load %arg2[%c0_1, %c0_2] : memref<32x256xbf16, #tpu.memory_space<vmem>>, vector<32x256xbf16>
    %cst = arith.constant dense<0.000000e+00> : vector<256x256xf32>
    %3 = tpu.matmul %1, %2, %cst {dimension_numbers = #tpu.dot_dimension_numbers<[1], [0], [0], [1], [0, 0, 1, 1], [], []>} : vector<256x32xbf16>, vector<32x256xbf16>, vector<256x256xf32> -> vector<256x256xf32>
    %c0_3 = arith.constant 0 : index
    %c0_4 = arith.constant 0 : index
    %4 = vector.load %arg3[%c0_3, %c0_4] : memref<1x256xf32, #tpu.memory_space<vmem>>, vector<1x256xf32>
    %5 = vector.broadcast %4 : vector<1x256xf32> to vector<256x256xf32>
    %6 = arith.addf %3, %5 : vector<256x256xf32>
    %7 = arith.truncf %6 : vector<256x256xf32> to vector<256x256xbf16>
    %cst_5 = arith.constant 0.000000e+00 : bf16
    %8 = vector.broadcast %cst_5 : bf16 to vector<256x256xbf16>
    %9 = arith.cmpf ogt, %7, %8 : vector<256x256xbf16>
    %cst_6 = arith.constant 1.000980e-02 : bf16
    %10 = vector.broadcast %cst_6 : bf16 to vector<256x256xbf16>
    %11 = arith.mulf %10, %7 : vector<256x256xbf16>
    %12 = arith.select %9, %7, %11 : vector<256x256xi1>, vector<256x256xbf16>
    %c0_7 = arith.constant 0 : index
    %c0_8 = arith.constant 0 : index
    %13 = vector.load %arg4[%c0_7, %c0_8] : memref<256x128xbf16, #tpu.memory_space<vmem>>, vector<256x128xbf16>
    %cst_9 = arith.constant dense<0.000000e+00> : vector<256x128xf32>
    %14 = tpu.matmul %12, %13, %cst_9 {dimension_numbers = #tpu.dot_dimension_numbers<[1], [0], [0], [1], [0, 0, 1, 1], [], []>} : vector<256x256xbf16>, vector<256x128xbf16>, vector<256x128xf32> -> vector<256x128xf32>
    %c0_10 = arith.constant 0 : index
    %c0_11 = arith.constant 0 : index
    %15 = vector.load %arg5[%c0_10, %c0_11] : memref<1x128xf32, #tpu.memory_space<vmem>>, vector<1x128xf32>
    %16 = vector.broadcast %15 : vector<1x128xf32> to vector<256x128xf32>
    %17 = arith.addf %14, %16 : vector<256x128xf32>
    %18 = arith.truncf %17 : vector<256x128xf32> to vector<256x128xbf16>
    %cst_12 = arith.constant 0.000000e+00 : bf16
    %19 = vector.broadcast %cst_12 : bf16 to vector<256x128xbf16>
    %20 = arith.cmpf ogt, %18, %19 : vector<256x128xbf16>
    %cst_13 = arith.constant 1.000980e-02 : bf16
    %21 = vector.broadcast %cst_13 : bf16 to vector<256x128xbf16>
    %22 = arith.mulf %21, %18 : vector<256x128xbf16>
    %23 = arith.select %20, %18, %22 : vector<256x128xi1>, vector<256x128xbf16>
    %c0_14 = arith.constant 0 : index
    %c0_15 = arith.constant 0 : index
    %24 = vector.load %arg6[%c0_14, %c0_15] : memref<128x128xbf16, #tpu.memory_space<vmem>>, vector<128x128xbf16>
    %cst_16 = arith.constant dense<0.000000e+00> : vector<256x128xf32>
    %25 = tpu.matmul %23, %24, %cst_16 {dimension_numbers = #tpu.dot_dimension_numbers<[1], [0], [0], [1], [0, 0, 1, 1], [], []>} : vector<256x128xbf16>, vector<128x128xbf16>, vector<256x128xf32> -> vector<256x128xf32>
    %c0_17 = arith.constant 0 : index
    %c0_18 = arith.constant 0 : index
    %26 = vector.load %arg7[%c0_17, %c0_18] : memref<1x128xf32, #tpu.memory_space<vmem>>, vector<1x128xf32>
    %27 = vector.broadcast %26 : vector<1x128xf32> to vector<256x128xf32>
    %28 = arith.addf %25, %27 : vector<256x128xf32>
    %29 = arith.truncf %28 : vector<256x128xf32> to vector<256x128xbf16>
    %cst_19 = arith.constant 0.000000e+00 : bf16
    %30 = vector.broadcast %cst_19 : bf16 to vector<256x128xbf16>
    %31 = arith.cmpf ogt, %29, %30 : vector<256x128xbf16>
    %cst_20 = arith.constant 1.000980e-02 : bf16
    %32 = vector.broadcast %cst_20 : bf16 to vector<256x128xbf16>
    %33 = arith.mulf %32, %29 : vector<256x128xbf16>
    %34 = arith.select %31, %29, %33 : vector<256x128xi1>, vector<256x128xbf16>
    %c0_21 = arith.constant 0 : index
    %c0_22 = arith.constant 0 : index
    %35 = vector.load %arg8[%c0_21, %c0_22] : memref<128x128xbf16, #tpu.memory_space<vmem>>, vector<128x128xbf16>
    %cst_23 = arith.constant dense<0.000000e+00> : vector<256x128xf32>
    %36 = tpu.matmul %34, %35, %cst_23 {dimension_numbers = #tpu.dot_dimension_numbers<[1], [0], [0], [1], [0, 0, 1, 1], [], []>} : vector<256x128xbf16>, vector<128x128xbf16>, vector<256x128xf32> -> vector<256x128xf32>
    %c0_24 = arith.constant 0 : index
    %c0_25 = arith.constant 0 : index
    %37 = vector.load %arg9[%c0_24, %c0_25] : memref<1x128xf32, #tpu.memory_space<vmem>>, vector<1x128xf32>
    %38 = vector.broadcast %37 : vector<1x128xf32> to vector<256x128xf32>
    %39 = arith.addf %36, %38 : vector<256x128xf32>
    %40 = arith.truncf %39 : vector<256x128xf32> to vector<256x128xbf16>
    %cst_26 = arith.constant 0.000000e+00 : bf16
    %41 = vector.broadcast %cst_26 : bf16 to vector<256x128xbf16>
    %42 = arith.cmpf ogt, %40, %41 : vector<256x128xbf16>
    %cst_27 = arith.constant 1.000980e-02 : bf16
    %43 = vector.broadcast %cst_27 : bf16 to vector<256x128xbf16>
    %44 = arith.mulf %43, %40 : vector<256x128xbf16>
    %45 = arith.select %42, %40, %44 : vector<256x128xi1>, vector<256x128xbf16>
    %c0_28 = arith.constant 0 : index
    %c0_29 = arith.constant 0 : index
    %46 = vector.load %arg10[%c0_28, %c0_29] : memref<128x128xbf16, #tpu.memory_space<vmem>>, vector<128x128xbf16>
    %cst_30 = arith.constant dense<0.000000e+00> : vector<256x128xf32>
    %47 = tpu.matmul %45, %46, %cst_30 {dimension_numbers = #tpu.dot_dimension_numbers<[1], [0], [0], [1], [0, 0, 1, 1], [], []>} : vector<256x128xbf16>, vector<128x128xbf16>, vector<256x128xf32> -> vector<256x128xf32>
    %c0_31 = arith.constant 0 : index
    %c0_32 = arith.constant 0 : index
    %48 = vector.load %arg11[%c0_31, %c0_32] : memref<1x128xf32, #tpu.memory_space<vmem>>, vector<1x128xf32>
    %49 = vector.broadcast %48 : vector<1x128xf32> to vector<256x128xf32>
    %50 = arith.addf %47, %49 : vector<256x128xf32>
    %51 = arith.truncf %50 : vector<256x128xf32> to vector<256x128xbf16>
    %cst_33 = arith.constant 0.000000e+00 : bf16
    %52 = vector.broadcast %cst_33 : bf16 to vector<256x128xbf16>
    %53 = arith.cmpf ogt, %51, %52 : vector<256x128xbf16>
    %cst_34 = arith.constant 1.000980e-02 : bf16
    %54 = vector.broadcast %cst_34 : bf16 to vector<256x128xbf16>
    %55 = arith.mulf %54, %51 : vector<256x128xbf16>
    %56 = arith.select %53, %51, %55 : vector<256x128xi1>, vector<256x128xbf16>
    %c0_35 = arith.constant 0 : index
    %c0_36 = arith.constant 0 : index
    %57 = vector.load %arg12[%c0_35, %c0_36] : memref<128x256xbf16, #tpu.memory_space<vmem>>, vector<128x256xbf16>
    %cst_37 = arith.constant dense<0.000000e+00> : vector<256x256xf32>
    %58 = tpu.matmul %56, %57, %cst_37 {dimension_numbers = #tpu.dot_dimension_numbers<[1], [0], [0], [1], [0, 0, 1, 1], [], []>} : vector<256x128xbf16>, vector<128x256xbf16>, vector<256x256xf32> -> vector<256x256xf32>
    %c0_38 = arith.constant 0 : index
    %c0_39 = arith.constant 0 : index
    %59 = vector.load %arg13[%c0_38, %c0_39] : memref<1x256xf32, #tpu.memory_space<vmem>>, vector<1x256xf32>
    %60 = vector.broadcast %59 : vector<1x256xf32> to vector<256x256xf32>
    %61 = arith.addf %58, %60 : vector<256x256xf32>
    %62 = arith.truncf %61 : vector<256x256xf32> to vector<256x256xbf16>
    %cst_40 = arith.constant 0.000000e+00 : bf16
    %63 = vector.broadcast %cst_40 : bf16 to vector<256x256xbf16>
    %64 = arith.cmpf ogt, %62, %63 : vector<256x256xbf16>
    %cst_41 = arith.constant 1.000980e-02 : bf16
    %65 = vector.broadcast %cst_41 : bf16 to vector<256x256xbf16>
    %66 = arith.mulf %65, %62 : vector<256x256xbf16>
    %67 = arith.select %64, %62, %66 : vector<256x256xi1>, vector<256x256xbf16>
    %c0_42 = arith.constant 0 : index
    %c0_43 = arith.constant 0 : index
    %68 = vector.load %arg14[%c0_42, %c0_43] : memref<256x32xbf16, #tpu.memory_space<vmem>>, vector<256x32xbf16>
    %cst_44 = arith.constant dense<0.000000e+00> : vector<256x32xf32>
    %69 = tpu.matmul %67, %68, %cst_44 {dimension_numbers = #tpu.dot_dimension_numbers<[1], [0], [0], [1], [0, 0, 1, 1], [], []>} : vector<256x256xbf16>, vector<256x32xbf16>, vector<256x32xf32> -> vector<256x32xf32>
    %c0_45 = arith.constant 0 : index
    %c0_46 = arith.constant 0 : index
    %70 = vector.load %arg15[%c0_45, %c0_46] : memref<1x32xf32, #tpu.memory_space<vmem>>, vector<1x32xf32>
    %71 = vector.broadcast %70 : vector<1x32xf32> to vector<256x32xf32>
    %72 = arith.addf %69, %71 : vector<256x32xf32>
    %c0_47 = arith.constant 0 : index
    %c0_48 = arith.constant 0 : index
    %73 = vector.load %arg16[%c0_47, %c0_48] : memref<256x32xf32, #tpu.memory_space<vmem>>, vector<256x32xf32>
    tpu.vector_store %arg16[%c0_47, %c0_48], %72 {strides = array<i32>} : memref<256x32xf32, #tpu.memory_space<vmem>>, vector<256x32xf32>,
    return
  }
  func.func @transform_0(%arg0: i32) -> (i32, i32) {
    %c0_i32 = arith.constant 0 : i32
    %c0_i32_0 = arith.constant 0 : i32
    return %arg0, %c0_i32 : i32, i32
  }
  func.func @transform_1(%arg0: i32) -> (i32, i32) {
    %c0_i32 = arith.constant 0 : i32
    %c0_i32_0 = arith.constant 0 : i32
    %c0_i32_1 = arith.constant 0 : i32
    return %c0_i32, %c0_i32_0 : i32, i32
  }
  func.func @transform_2(%arg0: i32) -> (i32, i32) {
    %c0_i32 = arith.constant 0 : i32
    %c0_i32_0 = arith.constant 0 : i32
    %c0_i32_1 = arith.constant 0 : i32
    return %c0_i32, %c0_i32_0 : i32, i32
  }
  func.func @transform_3(%arg0: i32) -> (i32, i32) {
    %c0_i32 = arith.constant 0 : i32
    %c0_i32_0 = arith.constant 0 : i32
    %c0_i32_1 = arith.constant 0 : i32
    return %c0_i32, %c0_i32_0 : i32, i32
  }
  func.func @transform_4(%arg0: i32) -> (i32, i32) {
    %c0_i32 = arith.constant 0 : i32
    %c0_i32_0 = arith.constant 0 : i32
    %c0_i32_1 = arith.constant 0 : i32
    return %c0_i32, %c0_i32_0 : i32, i32
  }
  func.func @transform_5(%arg0: i32) -> (i32, i32) {
    %c0_i32 = arith.constant 0 : i32
    %c0_i32_0 = arith.constant 0 : i32
    %c0_i32_1 = arith.constant 0 : i32
    return %c0_i32, %c0_i32_0 : i32, i32
  }
  func.func @transform_6(%arg0: i32) -> (i32, i32) {
    %c0_i32 = arith.constant 0 : i32
    %c0_i32_0 = arith.constant 0 : i32
    %c0_i32_1 = arith.constant 0 : i32
    return %c0_i32, %c0_i32_0 : i32, i32
  }
  func.func @transform_7(%arg0: i32) -> (i32, i32) {
    %c0_i32 = arith.constant 0 : i32
    %c0_i32_0 = arith.constant 0 : i32
    %c0_i32_1 = arith.constant 0 : i32
    return %c0_i32, %c0_i32_0 : i32, i32
  }
  func.func @transform_8(%arg0: i32) -> (i32, i32) {
    %c0_i32 = arith.constant 0 : i32
    %c0_i32_0 = arith.constant 0 : i32
    %c0_i32_1 = arith.constant 0 : i32
    return %c0_i32, %c0_i32_0 : i32, i32
  }
  func.func @transform_9(%arg0: i32) -> (i32, i32) {
    %c0_i32 = arith.constant 0 : i32
    %c0_i32_0 = arith.constant 0 : i32
    %c0_i32_1 = arith.constant 0 : i32
    return %c0_i32, %c0_i32_0 : i32, i32
  }
  func.func @transform_10(%arg0: i32) -> (i32, i32) {
    %c0_i32 = arith.constant 0 : i32
    %c0_i32_0 = arith.constant 0 : i32
    %c0_i32_1 = arith.constant 0 : i32
    return %c0_i32, %c0_i32_0 : i32, i32
  }
  func.func @transform_11(%arg0: i32) -> (i32, i32) {
    %c0_i32 = arith.constant 0 : i32
    %c0_i32_0 = arith.constant 0 : i32
    %c0_i32_1 = arith.constant 0 : i32
    return %c0_i32, %c0_i32_0 : i32, i32
  }
  func.func @transform_12(%arg0: i32) -> (i32, i32) {
    %c0_i32 = arith.constant 0 : i32
    %c0_i32_0 = arith.constant 0 : i32
    %c0_i32_1 = arith.constant 0 : i32
    return %c0_i32, %c0_i32_0 : i32, i32
  }
  func.func @transform_13(%arg0: i32) -> (i32, i32) {
    %c0_i32 = arith.constant 0 : i32
    %c0_i32_0 = arith.constant 0 : i32
    %c0_i32_1 = arith.constant 0 : i32
    return %c0_i32, %c0_i32_0 : i32, i32
  }
  func.func @transform_14(%arg0: i32) -> (i32, i32) {
    %c0_i32 = arith.constant 0 : i32
    %c0_i32_0 = arith.constant 0 : i32
    %c0_i32_1 = arith.constant 0 : i32
    return %c0_i32, %c0_i32_0 : i32, i32
  }
  func.func @transform_15(%arg0: i32) -> (i32, i32) {
    %c0_i32 = arith.constant 0 : i32
    %c0_i32_0 = arith.constant 0 : i32
    return %arg0, %c0_i32 : i32, i32
  }
}

</mosaic_0001>

<llo_original>
// kernel: _ae_forward_impl.1
$region0: #{_ae_forward_impl.1}
  #allocation0 [shape = 'u32[]', space=smem, size = 0x4, offset = 0x4, fixed_abs, tag = 'smem constant byte address 0x4 - core index']
  #allocation1 [shape = 'u32[144,128]{1,0:T(1,128)}', space=vmem, size = 0x12000, scoped, tag = 'internal scratch']
  %s0 = inlined_call_operand.vmem [shape: f32[256,32], index: 0, kind: input, shape index: {}]
  %s1 = inlined_call_operand.vmem [shape: bf16[32,256], index: 1, kind: input, shape index: {}]
  %s2 = inlined_call_operand.hbm [shape: f32[1,256], index: 2, kind: input, shape index: {}]
  %s3 = inlined_call_operand.vmem [shape: bf16[256,128], index: 3, kind: input, shape index: {}]
  %s4 = inlined_call_operand.vmem [shape: f32[1,128], index: 4, kind: input, shape index: {}]
  %s5 = inlined_call_operand.vmem [shape: bf16[128,128], index: 5, kind: input, shape index: {}]
  %s6 = inlined_call_operand.vmem [shape: f32[1,128], index: 6, kind: input, shape index: {}]
  %s7 = inlined_call_operand.vmem [shape: bf16[128,128], index: 7, kind: input, shape index: {}]
  %s8 = inlined_call_operand.vmem [shape: f32[1,128], index: 8, kind: input, shape index: {}]
  %s9 = inlined_call_operand.vmem [shape: bf16[128,128], index: 9, kind: input, shape index: {}]
  %s10 = inlined_call_operand.vmem [shape: f32[1,128], index: 10, kind: input, shape index: {}]
  %s11 = inlined_call_operand.vmem [shape: bf16[128,256], index: 11, kind: input, shape index: {}]
  %s12 = inlined_call_operand.vmem [shape: f32[1,256], index: 12, kind: input, shape index: {}]
  %s13 = inlined_call_operand.vmem [shape: bf16[256,32], index: 13, kind: input, shape index: {}]
  %s14 = inlined_call_operand.vmem [shape: f32[1,32], index: 14, kind: input, shape index: {}]
  %s15 = inlined_call_operand.vmem [shape: f32[256,32], index: 15, kind: output, shape index: {}]
  %s16 = sld [smem:[#allocation0]]
  $region74: #{_ae_forward_impl.1} parent=0
    _
  %s18 = ssub.s32 1, %s16
  %s19 = scalar_select 0, %s18, %s16
  $region1: #{_ae_forward_impl.1} parent=0
    #allocation2 [shape = 'u8[1024]{0}', space=vmem, size = 0x400, scoped, tag = 'input window, operand 2, single buffered']
    #allocation3 [shape = 's32[1]{0}', space=sflag, size = 0x4, scoped, tag = 'scoped memory for _ae_forward_impl.1']
    %20 = vsyncpa [#allocation3], 0
    // Predicated region
    $region2: #{_ae_forward_impl.1} parent=1 // pred_check
      _
    $region3: #{_ae_forward_impl.1} parent=1 // pred_check_branch
      %22 = sbr.rel (0) target = $region5
    $region4: #{_ae_forward_impl.1} parent=1 // pred_region
      _
    $region5: #{_ae_forward_impl.1} parent=1 // pred_fallthru
      _
    // Predicated region
    $region6: #{_ae_forward_impl.1} parent=1 // pred_check
      _
    $region7: #{_ae_forward_impl.1} parent=1 // pred_check_branch
      %24 = sbr.rel (0) target = $region9
    $region8: #{_ae_forward_impl.1} parent=1 // pred_region
      _
    $region9: #{_ae_forward_impl.1} parent=1 // pred_fallthru
      _
    // Predicated region
    $region10: #{_ae_forward_impl.1} parent=1 // pred_check
      _
    $region11: #{_ae_forward_impl.1} parent=1 // pred_check_branch
      %26 = sbr.rel (0) target = $region13
    $region12: #{_ae_forward_impl.1} parent=1 // pred_region
      %s28 = ssub.s32 32, 32
      %29 = vsyncadd [#allocation3], %s28
      %s31 = sshll.u32 [#allocation2], 4
      %s32 = int_to_ptr.vmem [resolvable:$true] %s31
      %34 = dma.hbm_to_vmem [thread:$0]  %s2, 32, %s32, [#allocation3]
    $region13: #{_ae_forward_impl.1} parent=1 // pred_fallthru
      _
    // Predicated region
    $region14: #{_ae_forward_impl.1} parent=1 // pred_check
      _
    $region15: #{_ae_forward_impl.1} parent=1 // pred_check_branch
      %36 = sbr.rel (0) target = $region17
    $region16: #{_ae_forward_impl.1} parent=1 // pred_region
      _
    $region17: #{_ae_forward_impl.1} parent=1 // pred_fallthru
      _
    // Predicated region
    $region18: #{_ae_forward_impl.1} parent=1 // pred_check
      _
    $region19: #{_ae_forward_impl.1} parent=1 // pred_check_branch
      %38 = sbr.rel (0) target = $region21
    $region20: #{_ae_forward_impl.1} parent=1 // pred_region
      _
    $region21: #{_ae_forward_impl.1} parent=1 // pred_fallthru
      _
    // Predicated region
    $region22: #{_ae_forward_impl.1} parent=1 // pred_check
      _
    $region23: #{_ae_forward_impl.1} parent=1 // pred_check_branch
      %40 = sbr.rel (0) target = $region25
    $region24: #{_ae_forward_impl.1} parent=1 // pred_region
      _
    $region25: #{_ae_forward_impl.1} parent=1 // pred_fallthru
      _
    // Predicated region
    $region26: #{_ae_forward_impl.1} parent=1 // pred_check
      _
    $region27: #{_ae_forward_impl.1} parent=1 // pred_check_branch
      %42 = sbr.rel (0) target = $region29
    $region28: #{_ae_forward_impl.1} parent=1 // pred_region
      _
    $region29: #{_ae_forward_impl.1} parent=1 // pred_fallthru
      _
    // Predicated region
    $region30: #{_ae_forward_impl.1} parent=1 // pred_check
      _
    $region31: #{_ae_forward_impl.1} parent=1 // pred_check_branch
      %44 = sbr.rel (0) target = $region33
    $region32: #{_ae_forward_impl.1} parent=1 // pred_region
      _
    $region33: #{_ae_forward_impl.1} parent=1 // pred_fallthru
      _
    // Predicated region
    $region34: #{_ae_forward_impl.1} parent=1 // pred_check
      _
    $region35: #{_ae_forward_impl.1} parent=1 // pred_check_branch
      %46 = sbr.rel (0) target = $region37
    $region36: #{_ae_forward_impl.1} parent=1 // pred_region
      _
    $region37: #{_ae_forward_impl.1} parent=1 // pred_fallthru
      _
    // Predicated region
    $region38: #{_ae_forward_impl.1} parent=1 // pred_check
      _
    $region39: #{_ae_forward_impl.1} parent=1 // pred_check_branch
      %48 = sbr.rel (0) target = $region41
    $region40: #{_ae_forward_impl.1} parent=1 // pred_region
      _
    $region41: #{_ae_forward_impl.1} parent=1 // pred_fallthru
      _
    // Predicated region
    $region42: #{_ae_forward_impl.1} parent=1 // pred_check
      _
    $region43: #{_ae_forward_impl.1} parent=1 // pred_check_branch
      %50 = sbr.rel (0) target = $region45
    $region44: #{_ae_forward_impl.1} parent=1 // pred_region
      _
    $region45: #{_ae_forward_impl.1} parent=1 // pred_fallthru
      _
    // Predicated region
    $region46: #{_ae_forward_impl.1} parent=1 // pred_check
      _
    $region47: #{_ae_forward_impl.1} parent=1 // pred_check_branch
      %52 = sbr.rel (0) target = $region49
    $region48: #{_ae_forward_impl.1} parent=1 // pred_region
      _
    $region49: #{_ae_forward_impl.1} parent=1 // pred_fallthru
      _
    // Predicated region
    $region50: #{_ae_forward_impl.1} parent=1 // pred_check
      _
    $region51: #{_ae_forward_impl.1} parent=1 // pred_check_branch
      %54 = sbr.rel (0) target = $region53
    $region52: #{_ae_forward_impl.1} parent=1 // pred_region
      _
    $region53: #{_ae_forward_impl.1} parent=1 // pred_fallthru
      _
    // Predicated region
    $region54: #{_ae_forward_impl.1} parent=1 // pred_check
      _
    $region55: #{_ae_forward_impl.1} parent=1 // pred_check_branch
      %56 = sbr.rel (0) target = $region57
    $region56: #{_ae_forward_impl.1} parent=1 // pred_region
      _
    $region57: #{_ae_forward_impl.1} parent=1 // pred_fallthru
      _
    // Predicated region
    $region58: #{_ae_forward_impl.1} parent=1 // pred_check
      _
    $region59: #{_ae_forward_impl.1} parent=1 // pred_check_branch
      %58 = sbr.rel (0) target = $region61
    $region60: #{_ae_forward_impl.1} parent=1 // pred_region
      _
    $region61: #{_ae_forward_impl.1} parent=1 // pred_fallthru
      _
    // Predicated region
    $region62: #{_ae_forward_impl.1} parent=1 // pred_check
      _
    $region63: #{_ae_forward_impl.1} parent=1 // pred_check_branch
      %60 = sbr.rel (0) target = $region65
    $region64: #{_ae_forward_impl.1} parent=1 // pred_region
      %61 = dma.done [#allocation3], 32
    $region65: #{_ae_forward_impl.1} parent=1 // pred_fallthru
      _
    %v64 = vld [vmem:[%s0] sm:$0xff]
    %v65 = vld [vmem:[%s0 + $0x8] sm:$0xff]
    %v66 = vld [vmem:[%s0 + $0x10] sm:$0xff]
    %v67 = vld [vmem:[%s0 + $0x18] sm:$0xff]
    %v68 = vld [vmem:[%s0 + $0x20] sm:$0xff]
    %v69 = vld [vmem:[%s0 + $0x28] sm:$0xff]
    %v70 = vld [vmem:[%s0 + $0x30] sm:$0xff]
    %v71 = vld [vmem:[%s0 + $0x38] sm:$0xff]
    %v72 = vld [vmem:[%s0 + $0x40] sm:$0xff]
    %v73 = vld [vmem:[%s0 + $0x48] sm:$0xff]
    %v74 = vld [vmem:[%s0 + $0x50] sm:$0xff]
    %v75 = vld [vmem:[%s0 + $0x58] sm:$0xff]
    %v76 = vld [vmem:[%s0 + $0x60] sm:$0xff]
    %v77 = vld [vmem:[%s0 + $0x68] sm:$0xff]
    %v78 = vld [vmem:[%s0 + $0x70] sm:$0xff]
    %v79 = vld [vmem:[%s0 + $0x78] sm:$0xff]
    %v80 = vld [vmem:[%s0 + $0x80] sm:$0xff]
    %v81 = vld [vmem:[%s0 + $0x88] sm:$0xff]
    %v82 = vld [vmem:[%s0 + $0x90] sm:$0xff]
    %v83 = vld [vmem:[%s0 + $0x98] sm:$0xff]
    %v84 = vld [vmem:[%s0 + $0xa0] sm:$0xff]
    %v85 = vld [vmem:[%s0 + $0xa8] sm:$0xff]
    %v86 = vld [vmem:[%s0 + $0xb0] sm:$0xff]
    %v87 = vld [vmem:[%s0 + $0xb8] sm:$0xff]
    %v88 = vld [vmem:[%s0 + $0xc0] sm:$0xff]
    %v89 = vld [vmem:[%s0 + $0xc8] sm:$0xff]
    %v90 = vld [vmem:[%s0 + $0xd0] sm:$0xff]
    %v91 = vld [vmem:[%s0 + $0xd8] sm:$0xff]
    %v92 = vld [vmem:[%s0 + $0xe0] sm:$0xff]
    %v93 = vld [vmem:[%s0 + $0xe8] sm:$0xff]
    %v94 = vld [vmem:[%s0 + $0xf0] sm:$0xff]
    %v95 = vld [vmem:[%s0 + $0xf8] sm:$0xff]
    %v96 = vpack.c.bf16 %v65, %v64
    %v97 = vpack.c.bf16 %v67, %v66
    %v98 = vpack.c.bf16 %v69, %v68
    %v99 = vpack.c.bf16 %v71, %v70
    %v100 = vpack.c.bf16 %v73, %v72
    %v101 = vpack.c.bf16 %v75, %v74
    %v102 = vpack.c.bf16 %v77, %v76
    %v103 = vpack.c.bf16 %v79, %v78
    %v104 = vpack.c.bf16 %v81, %v80
    %v105 = vpack.c.bf16 %v83, %v82
    %v106 = vpack.c.bf16 %v85, %v84
    %v107 = vpack.c.bf16 %v87, %v86
    %v108 = vpack.c.bf16 %v89, %v88
    %v109 = vpack.c.bf16 %v91, %v90
    %v110 = vpack.c.bf16 %v93, %v92
    %v111 = vpack.c.bf16 %v95, %v94
    %v112 = vld [vmem:[%s1] sm:$0xff]
    %v113 = vld [vmem:[%s1 + $0x8] sm:$0xff]
    %v114 = vld [vmem:[%s1 + $0x10] sm:$0xff]
    %v115 = vld [vmem:[%s1 + $0x18] sm:$0xff]
    %v116 = vld [vmem:[#allocation2] sm:$0x3]
    %v118 = vlaneseq
    %v119 = vshrl.u32 %v118, 7
    %v120 = vsub.s32 0, %v119
    %v121 = vrot.slane %v116, %v120
    %v122 = vlaneseq
    %v123 = vshrl.u32 %v122, 7
    %v124 = vsub.s32 1, %v123
    %v125 = vrot.slane %v116, %v124
    %v132 = vunpack.c.l.b16 %v112
    %v133 = vunpack.c.h.b16 %v112
    %v134 = vunpack.c.l.b16 %v113
    %v135 = vunpack.c.h.b16 %v113
    %v136 = vunpack.c.l.b16 %v114
    %v137 = vunpack.c.h.b16 %v114
    %v138 = vunpack.c.l.b16 %v115
    %v139 = vunpack.c.h.b16 %v115
    %v140 = vpack.c.b16 %v134, %v132
    %v141 = vpack.c.b16 %v135, %v133
    %v142 = vpack.c.b16 %v138, %v136
    %v143 = vpack.c.b16 %v139, %v137
    %vm148 = vcmask 261120
    %v150 = vsel %vm148, %v96, 0
    %v153 = vsel %vm148, %v97, 0
    %v156 = vsel %vm148, %v98, 0
    %v159 = vsel %vm148, %v99, 0
    %v162 = vsel %vm148, %v100, 0
    %v165 = vsel %vm148, %v101, 0
    %v168 = vsel %vm148, %v102, 0
    %v171 = vsel %vm148, %v103, 0
    %v174 = vsel %vm148, %v104, 0
    %v177 = vsel %vm148, %v105, 0
    %v180 = vsel %vm148, %v106, 0
    %v183 = vsel %vm148, %v107, 0
    %v186 = vsel %vm148, %v108, 0
    %v189 = vsel %vm148, %v109, 0
    %v192 = vsel %vm148, %v110, 0
    %v195 = vsel %vm148, %v111, 0
    %197 = vmatprep.subr.bf16.mxu0 0
    %198 = vmatpush1.bf16.msra.mxu0 0
    %199 = vmatprep.subr.bf16.mxu0 0
    %200 = vmatpush1.bf16.msra.mxu0 0
    %201 = vmatprep.subr.bf16.mxu0 0
    %202 = vmatpush1.bf16.msra.mxu0 0
    %203 = vmatprep.subr.bf16.mxu0 0
    %204 = vmatpush1.bf16.msra.mxu0 0
    %205 = vmatprep.subr.bf16.mxu0 0
    %206 = vmatpush1.bf16.msra.mxu0 0
    %207 = vmatprep.subr.bf16.mxu0 0
    %208 = vmatpush1.bf16.msra.mxu0 0
    %209 = vmatprep.subr.bf16.mxu0 %v143
    %210 = vmatpush1.bf16.msra.mxu0 %v142
    %211 = vmatprep.subr.bf16.mxu0 %v141
    %212 = vmatpush1.bf16.msra.mxu0 %v140
    %213 = vmatprep.subr.bf16.mxu0 0
    %214 = vmatpush2.bf16.msra.mxu0 0
    %215 = vmatprep.subr.bf16.mxu0 0
    %216 = vmatpush2.bf16.msra.mxu0 0
    %217 = vmatprep.subr.bf16.mxu0 0
    %218 = vmatpush2.bf16.msra.mxu0 0
    %219 = vmatprep.subr.bf16.mxu0 0
    %220 = vmatpush2.bf16.msra.mxu0 0
    %221 = vmatprep.subr.bf16.mxu0 0
    %222 = vmatpush2.bf16.msra.mxu0 0
    %223 = vmatprep.subr.bf16.mxu0 0
    %224 = vmatpush2.bf16.msra.mxu0 0
    %225 = vmatprep.subr.bf16.mxu0 0
    %226 = vmatpush2.bf16.msra.mxu0 0
    %227 = vmatprep.subr.bf16.mxu0 0
    %228 = vmatpush2.bf16.msra.mxu0 0
    %229 = vmatprep.mubr.bf16.mxu0 0
    %230 = vmatmul.mubr.bf16.gmra.mxu0 %v150
    %v231 = vpop.f32.mrf.mxu0
    %v232 = vadd.f32 %v121, %v231
    %v233 = vpop.f32.mrf.mxu0
    %v234 = vadd.f32 %v125, %v233
    %v235 = vpop.f32.mrf.mxu0
    %v236 = vadd.f32 %v121, %v235
    %v237 = vpop.f32.mrf.mxu0
    %v238 = vadd.f32 %v125, %v237
    %239 = vmatprep.mubr.bf16.mxu0 0
    %240 = vmatmul.mubr.bf16.gmra.mxu0 %v153
    %v241 = vpop.f32.mrf.mxu0
    %v242 = vadd.f32 %v121, %v241
    %v243 = vpop.f32.mrf.mxu0
    %v244 = vadd.f32 %v125, %v243
    %v245 = vpop.f32.mrf.mxu0
    %v246 = vadd.f32 %v121, %v245
    %v247 = vpop.f32.mrf.mxu0
    %v248 = vadd.f32 %v125, %v247
    %249 = vmatprep.mubr.bf16.mxu0 0
    %250 = vmatmul.mubr.bf16.gmra.mxu0 %v156
    %v251 = vpop.f32.mrf.mxu0
    %v252 = vadd.f32 %v121, %v251
    %v253 = vpop.f32.mrf.mxu0
    %v254 = vadd.f32 %v125, %v253
    %v255 = vpop.f32.mrf.mxu0
    %v256 = vadd.f32 %v121, %v255
    %v257 = vpop.f32.mrf.mxu0
    %v258 = vadd.f32 %v125, %v257
    %259 = vmatprep.mubr.bf16.mxu0 0
    %260 = vmatmul.mubr.bf16.gmra.mxu0 %v159
    %v261 = vpop.f32.mrf.mxu0
    %v262 = vadd.f32 %v121, %v261
    %v263 = vpop.f32.mrf.mxu0
    %v264 = vadd.f32 %v125, %v263
    %v265 = vpop.f32.mrf.mxu0
    %v266 = vadd.f32 %v121, %v265
    %v267 = vpop.f32.mrf.mxu0
    %v268 = vadd.f32 %v125, %v267
    %269 = vmatprep.mubr.bf16.mxu0 0
    %270 = vmatmul.mubr.bf16.gmra.mxu0 %v162
    %v271 = vpop.f32.mrf.mxu0
    %v272 = vadd.f32 %v121, %v271
    %v273 = vpop.f32.mrf.mxu0
    %v274 = vadd.f32 %v125, %v273
    %v275 = vpop.f32.mrf.mxu0
    %v276 = vadd.f32 %v121, %v275
    %v277 = vpop.f32.mrf.mxu0
    %v278 = vadd.f32 %v125, %v277
    %279 = vmatprep.mubr.bf16.mxu0 0
    %280 = vmatmul.mubr.bf16.gmra.mxu0 %v165
    %v281 = vpop.f32.mrf.mxu0
    %v282 = vadd.f32 %v121, %v281
    %v283 = vpop.f32.mrf.mxu0
    %v284 = vadd.f32 %v125, %v283
    %v285 = vpop.f32.mrf.mxu0
    %v286 = vadd.f32 %v121, %v285
    %v287 = vpop.f32.mrf.mxu0
    %v288 = vadd.f32 %v125, %v287
    %289 = vmatprep.mubr.bf16.mxu0 0
    %290 = vmatmul.mubr.bf16.gmra.mxu0 %v168
    %v291 = vpop.f32.mrf.mxu0
    %v292 = vadd.f32 %v121, %v291
    %v293 = vpop.f32.mrf.mxu0
    %v294 = vadd.f32 %v125, %v293
    %v295 = vpop.f32.mrf.mxu0
    %v296 = vadd.f32 %v121, %v295
    %v297 = vpop.f32.mrf.mxu0
    %v298 = vadd.f32 %v125, %v297
    %299 = vmatprep.mubr.bf16.mxu0 0
    %300 = vmatmul.mubr.bf16.gmra.mxu0 %v171
    %v301 = vpop.f32.mrf.mxu0
    %v302 = vadd.f32 %v121, %v301
    %v303 = vpop.f32.mrf.mxu0
    %v304 = vadd.f32 %v125, %v303
    %v305 = vpop.f32.mrf.mxu0
    %v306 = vadd.f32 %v121, %v305
    %v307 = vpop.f32.mrf.mxu0
    %v308 = vadd.f32 %v125, %v307
    %309 = vmatprep.mubr.bf16.mxu0 0
    %310 = vmatmul.mubr.bf16.gmra.mxu0 %v174
    %v311 = vpop.f32.mrf.mxu0
    %v312 = vadd.f32 %v121, %v311
    %v313 = vpop.f32.mrf.mxu0
    %v314 = vadd.f32 %v125, %v313
    %v315 = vpop.f32.mrf.mxu0
    %v316 = vadd.f32 %v121, %v315
    %v317 = vpop.f32.mrf.mxu0
    %v318 = vadd.f32 %v125, %v317
    %319 = vmatprep.mubr.bf16.mxu0 0
    %320 = vmatmul.mubr.bf16.gmra.mxu0 %v177
    %v321 = vpop.f32.mrf.mxu0
    %v322 = vadd.f32 %v121, %v321
    %v323 = vpop.f32.mrf.mxu0
    %v324 = vadd.f32 %v125, %v323
    %v325 = vpop.f32.mrf.mxu0
    %v326 = vadd.f32 %v121, %v325
    %v327 = vpop.f32.mrf.mxu0
    %v328 = vadd.f32 %v125, %v327
    %329 = vmatprep.mubr.bf16.mxu0 0
    %330 = vmatmul.mubr.bf16.gmra.mxu0 %v180
    %v331 = vpop.f32.mrf.mxu0
    %v332 = vadd.f32 %v121, %v331
    %v333 = vpop.f32.mrf.mxu0
    %v334 = vadd.f32 %v125, %v333
    %v335 = vpop.f32.mrf.mxu0
    %v336 = vadd.f32 %v121, %v335
    %v337 = vpop.f32.mrf.mxu0
    %v338 = vadd.f32 %v125, %v337
    %339 = vmatprep.mubr.bf16.mxu0 0
    %340 = vmatmul.mubr.bf16.gmra.mxu0 %v183
    %v341 = vpop.f32.mrf.mxu0
    %v342 = vadd.f32 %v121, %v341
    %v343 = vpop.f32.mrf.mxu0
    %v344 = vadd.f32 %v125, %v343
    %v345 = vpop.f32.mrf.mxu0
    %v346 = vadd.f32 %v121, %v345
    %v347 = vpop.f32.mrf.mxu0
    %v348 = vadd.f32 %v125, %v347
    %349 = vmatprep.mubr.bf16.mxu0 0
    %350 = vmatmul.mubr.bf16.gmra.mxu0 %v186
    %v351 = vpop.f32.mrf.mxu0
    %v352 = vadd.f32 %v121, %v351
    %v353 = vpop.f32.mrf.mxu0
    %v354 = vadd.f32 %v125, %v353
    %v355 = vpop.f32.mrf.mxu0
    %v356 = vadd.f32 %v121, %v355
    %v357 = vpop.f32.mrf.mxu0
    %v358 = vadd.f32 %v125, %v357
    %359 = vmatprep.mubr.bf16.mxu0 0
    %360 = vmatmul.mubr.bf16.gmra.mxu0 %v189
    %v361 = vpop.f32.mrf.mxu0
    %v362 = vadd.f32 %v121, %v361
    %v363 = vpop.f32.mrf.mxu0
    %v364 = vadd.f32 %v125, %v363
    %v365 = vpop.f32.mrf.mxu0
    %v366 = vadd.f32 %v121, %v365
    %v367 = vpop.f32.mrf.mxu0
    %v368 = vadd.f32 %v125, %v367
    %369 = vmatprep.mubr.bf16.mxu0 0
    %370 = vmatmul.mubr.bf16.gmra.mxu0 %v192
    %v371 = vpop.f32.mrf.mxu0
    %v372 = vadd.f32 %v121, %v371
    %v373 = vpop.f32.mrf.mxu0
    %v374 = vadd.f32 %v125, %v373
    %v375 = vpop.f32.mrf.mxu0
    %v376 = vadd.f32 %v121, %v375
    %v377 = vpop.f32.mrf.mxu0
    %v378 = vadd.f32 %v125, %v377
    %379 = vmatprep.mubr.bf16.mxu0 0
    %380 = vmatmul.mubr.bf16.gmra.mxu0 %v195
    %v381 = vpop.f32.mrf.mxu0
    %v382 = vadd.f32 %v121, %v381
    %v383 = vpop.f32.mrf.mxu0
    %v384 = vadd.f32 %v125, %v383
    %v385 = vpop.f32.mrf.mxu0
    %v386 = vadd.f32 %v121, %v385
    %v387 = vpop.f32.mrf.mxu0
    %v388 = vadd.f32 %v125, %v387
    %389 = vdwg.mxu0
    %v390 = vpack.c.bf16 %v236, %v232
    %v391 = vpack.c.bf16 %v238, %v234
    %v392 = vpack.c.bf16 %v246, %v242
    %v393 = vpack.c.bf16 %v248, %v244
    %v394 = vpack.c.bf16 %v256, %v252
    %v395 = vpack.c.bf16 %v258, %v254
    %v396 = vpack.c.bf16 %v266, %v262
    %v397 = vpack.c.bf16 %v268, %v264
    %v398 = vpack.c.bf16 %v276, %v272
    %v399 = vpack.c.bf16 %v278, %v274
    %v400 = vpack.c.bf16 %v286, %v282
    %v401 = vpack.c.bf16 %v288, %v284
    %v402 = vpack.c.bf16 %v296, %v292
    %v403 = vpack.c.bf16 %v298, %v294
    %v404 = vpack.c.bf16 %v306, %v302
    %v405 = vpack.c.bf16 %v308, %v304
    %v406 = vpack.c.bf16 %v316, %v312
    %v407 = vpack.c.bf16 %v318, %v314
    %v408 = vpack.c.bf16 %v326, %v322
    %v409 = vpack.c.bf16 %v328, %v324
    %v410 = vpack.c.bf16 %v336, %v332
    %v411 = vpack.c.bf16 %v338, %v334
    %v412 = vpack.c.bf16 %v346, %v342
    %v413 = vpack.c.bf16 %v348, %v344
    %v414 = vpack.c.bf16 %v356, %v352
    %v415 = vpack.c.bf16 %v358, %v354
    %v416 = vpack.c.bf16 %v366, %v362
    %v417 = vpack.c.bf16 %v368, %v364
    %v418 = vpack.c.bf16 %v376, %v372
    %v419 = vpack.c.bf16 %v378, %v374
    %v420 = vpack.c.bf16 %v386, %v382
    %v421 = vpack.c.bf16 %v388, %v384
    %vm422 = vcmp.gt.bf16.partialorder %v390, 0
    %vm423 = vcmp.gt.bf16.partialorder %v391, 0
    %vm424 = vcmp.gt.bf16.partialorder %v392, 0
    %vm425 = vcmp.gt.bf16.partialorder %v393, 0
    %vm426 = vcmp.gt.bf16.partialorder %v394, 0
    %vm427 = vcmp.gt.bf16.partialorder %v395, 0
    %vm428 = vcmp.gt.bf16.partialorder %v396, 0
    %vm429 = vcmp.gt.bf16.partialorder %v397, 0
    %vm430 = vcmp.gt.bf16.partialorder %v398, 0
    %vm431 = vcmp.gt.bf16.partialorder %v399, 0
    %vm432 = vcmp.gt.bf16.partialorder %v400, 0
    %vm433 = vcmp.gt.bf16.partialorder %v401, 0
    %vm434 = vcmp.gt.bf16.partialorder %v402, 0
    %vm435 = vcmp.gt.bf16.partialorder %v403, 0
    %vm436 = vcmp.gt.bf16.partialorder %v404, 0
    %vm437 = vcmp.gt.bf16.partialorder %v405, 0
    %vm438 = vcmp.gt.bf16.partialorder %v406, 0
    %vm439 = vcmp.gt.bf16.partialorder %v407, 0
    %vm440 = vcmp.gt.bf16.partialorder %v408, 0
    %vm441 = vcmp.gt.bf16.partialorder %v409, 0
    %vm442 = vcmp.gt.bf16.partialorder %v410, 0
    %vm443 = vcmp.gt.bf16.partialorder %v411, 0
    %vm444 = vcmp.gt.bf16.partialorder %v412, 0
    %vm445 = vcmp.gt.bf16.partialorder %v413, 0
    %vm446 = vcmp.gt.bf16.partialorder %v414, 0
    %vm447 = vcmp.gt.bf16.partialorder %v415, 0
    %vm448 = vcmp.gt.bf16.partialorder %v416, 0
    %vm449 = vcmp.gt.bf16.partialorder %v417, 0
    %vm450 = vcmp.gt.bf16.partialorder %v418, 0
    %vm451 = vcmp.gt.bf16.partialorder %v419, 0
    %vm452 = vcmp.gt.bf16.partialorder %v420, 0
    %vm453 = vcmp.gt.bf16.partialorder %v421, 0
    %v454 = vmul.bf16 %v390, 1009007652
    %v455 = vmul.bf16 %v391, 1009007652
    %v456 = vmul.bf16 %v392, 1009007652
    %v457 = vmul.bf16 %v393, 1009007652
    %v458 = vmul.bf16 %v394, 1009007652
    %v459 = vmul.bf16 %v395, 1009007652
    %v460 = vmul.bf16 %v396, 1009007652
    %v461 = vmul.bf16 %v397, 1009007652
    %v462 = vmul.bf16 %v398, 1009007652
    %v463 = vmul.bf16 %v399, 1009007652
    %v464 = vmul.bf16 %v400, 1009007652
    %v465 = vmul.bf16 %v401, 1009007652
    %v466 = vmul.bf16 %v402, 1009007652
    %v467 = vmul.bf16 %v403, 1009007652
    %v468 = vmul.bf16 %v404, 1009007652
    %v469 = vmul.bf16 %v405, 1009007652
    %v470 = vmul.bf16 %v406, 1009007652
    %v471 = vmul.bf16 %v407, 1009007652
    %v472 = vmul.bf16 %v408, 1009007652
    %v473 = vmul.bf16 %v409, 1009007652
    %v474 = vmul.bf16 %v410, 1009007652
    %v475 = vmul.bf16 %v411, 1009007652
    %v476 = vmul.bf16 %v412, 1009007652
    %v477 = vmul.bf16 %v413, 1009007652
    %v478 = vmul.bf16 %v414, 1009007652
    %v479 = vmul.bf16 %v415, 1009007652
    %v480 = vmul.bf16 %v416, 1009007652
    %v481 = vmul.bf16 %v417, 1009007652
    %v482 = vmul.bf16 %v418, 1009007652
    %v483 = vmul.bf16 %v419, 1009007652
    %v484 = vmul.bf16 %v420, 1009007652
    %v485 = vmul.bf16 %v421, 1009007652
    %v486 = vsel %vm422, %v390, %v454
    %v487 = vsel %vm423, %v391, %v455
    %v488 = vsel %vm424, %v392, %v456
    %v489 = vsel %vm425, %v393, %v457
    %v490 = vsel %vm426, %v394, %v458
    %v491 = vsel %vm427, %v395, %v459
    %v492 = vsel %vm428, %v396, %v460
    %v493 = vsel %vm429, %v397, %v461
    %v494 = vsel %vm430, %v398, %v462
    %v495 = vsel %vm431, %v399, %v463
    %v496 = vsel %vm432, %v400, %v464
    %v497 = vsel %vm433, %v401, %v465
    %v498 = vsel %vm434, %v402, %v466
    %v499 = vsel %vm435, %v403, %v467
    %v500 = vsel %vm436, %v404, %v468
    %v501 = vsel %vm437, %v405, %v469
    %v502 = vsel %vm438, %v406, %v470
    %v503 = vsel %vm439, %v407, %v471
    %v504 = vsel %vm440, %v408, %v472
    %v505 = vsel %vm441, %v409, %v473
    %v506 = vsel %vm442, %v410, %v474
    %v507 = vsel %vm443, %v411, %v475
    %v508 = vsel %vm444, %v412, %v476
    %v509 = vsel %vm445, %v413, %v477
    %v510 = vsel %vm446, %v414, %v478
    %v511 = vsel %vm447, %v415, %v479
    %v512 = vsel %vm448, %v416, %v480
    %v513 = vsel %vm449, %v417, %v481
    %v514 = vsel %vm450, %v418, %v482
    %v515 = vsel %vm451, %v419, %v483
    %v516 = vsel %vm452, %v420, %v484
    %v517 = vsel %vm453, %v421, %v485
    %v518 = vld [vmem:[%s3] sm:$0xf]
    %v519 = vld [vmem:[%s3 + $0x4] sm:$0xf]
    %v520 = vld [vmem:[%s3 + $0x8] sm:$0xf]
    %v521 = vld [vmem:[%s3 + $0xc] sm:$0xf]
    %v522 = vld [vmem:[%s3 + $0x10] sm:$0xf]
    %v523 = vld [vmem:[%s3 + $0x14] sm:$0xf]
    %v524 = vld [vmem:[%s3 + $0x18] sm:$0xf]
    %v525 = vld [vmem:[%s3 + $0x1c] sm:$0xf]
    %v526 = vld [vmem:[%s3 + $0x20] sm:$0xf]
    %v527 = vld [vmem:[%s3 + $0x24] sm:$0xf]
    %v528 = vld [vmem:[%s3 + $0x28] sm:$0xf]
    %v529 = vld [vmem:[%s3 + $0x2c] sm:$0xf]
    %v530 = vld [vmem:[%s3 + $0x30] sm:$0xf]
    %v531 = vld [vmem:[%s3 + $0x34] sm:$0xf]
    %v532 = vld [vmem:[%s3 + $0x38] sm:$0xf]
    %v533 = vld [vmem:[%s3 + $0x3c] sm:$0xf]
    %v534 = vld [vmem:[%s3 + $0x40] sm:$0xf]
    %v535 = vld [vmem:[%s3 + $0x44] sm:$0xf]
    %v536 = vld [vmem:[%s3 + $0x48] sm:$0xf]
    %v537 = vld [vmem:[%s3 + $0x4c] sm:$0xf]
    %v538 = vld [vmem:[%s3 + $0x50] sm:$0xf]
    %v539 = vld [vmem:[%s3 + $0x54] sm:$0xf]
    %v540 = vld [vmem:[%s3 + $0x58] sm:$0xf]
    %v541 = vld [vmem:[%s3 + $0x5c] sm:$0xf]
    %v542 = vld [vmem:[%s3 + $0x60] sm:$0xf]
    %v543 = vld [vmem:[%s3 + $0x64] sm:$0xf]
    %v544 = vld [vmem:[%s3 + $0x68] sm:$0xf]
    %v545 = vld [vmem:[%s3 + $0x6c] sm:$0xf]
    %v546 = vld [vmem:[%s3 + $0x70] sm:$0xf]
    %v547 = vld [vmem:[%s3 + $0x74] sm:$0xf]
    %v548 = vld [vmem:[%s3 + $0x78] sm:$0xf]
    %v549 = vld [vmem:[%s3 + $0x7c] sm:$0xf]
    %v550 = vld [vmem:[%s4] sm:$0x1]
    %v552 = vlaneseq
    %v553 = vshrl.u32 %v552, 7
    %v554 = vsub.s32 0, %v553
    %v555 = vrot.slane %v550, %v554
    %v589 = vunpack.c.l.b16 %v518
    %v590 = vunpack.c.l.b16 %v519
    %v591 = vunpack.c.l.b16 %v520
    %v592 = vunpack.c.l.b16 %v521
    %v593 = vunpack.c.l.b16 %v522
    %v594 = vunpack.c.l.b16 %v523
    %v595 = vunpack.c.l.b16 %v524
    %v596 = vunpack.c.l.b16 %v525
    %v597 = vunpack.c.l.b16 %v526
    %v598 = vunpack.c.l.b16 %v527
    %v599 = vunpack.c.l.b16 %v528
    %v600 = vunpack.c.l.b16 %v529
    %v601 = vunpack.c.l.b16 %v530
    %v602 = vunpack.c.l.b16 %v531
    %v603 = vunpack.c.l.b16 %v532
    %v604 = vunpack.c.l.b16 %v533
    %v605 = vunpack.c.l.b16 %v534
    %v606 = vunpack.c.l.b16 %v535
    %v607 = vunpack.c.l.b16 %v536
    %v608 = vunpack.c.l.b16 %v537
    %v609 = vunpack.c.l.b16 %v538
    %v610 = vunpack.c.l.b16 %v539
    %v611 = vunpack.c.l.b16 %v540
    %v612 = vunpack.c.l.b16 %v541
    %v613 = vunpack.c.l.b16 %v542
    %v614 = vunpack.c.l.b16 %v543
    %v615 = vunpack.c.l.b16 %v544
    %v616 = vunpack.c.l.b16 %v545
    %v617 = vunpack.c.l.b16 %v546
    %v618 = vunpack.c.l.b16 %v547
    %v619 = vunpack.c.l.b16 %v548
    %v620 = vunpack.c.l.b16 %v549
    %v621 = vpack.c.b16 %v590, %v589
    %v622 = vpack.c.b16 %v592, %v591
    %v623 = vpack.c.b16 %v594, %v593
    %v624 = vpack.c.b16 %v596, %v595
    %v625 = vpack.c.b16 %v598, %v597
    %v626 = vpack.c.b16 %v600, %v599
    %v627 = vpack.c.b16 %v602, %v601
    %v628 = vpack.c.b16 %v604, %v603
    %v629 = vpack.c.b16 %v606, %v605
    %v630 = vpack.c.b16 %v608, %v607
    %v631 = vpack.c.b16 %v610, %v609
    %v632 = vpack.c.b16 %v612, %v611
    %v633 = vpack.c.b16 %v614, %v613
    %v634 = vpack.c.b16 %v616, %v615
    %v635 = vpack.c.b16 %v618, %v617
    %v636 = vpack.c.b16 %v620, %v619
    %653 = vmatprep.subr.bf16.mxu0 0
    %654 = vmatpush1.bf16.msra.mxu0 %v628
    %655 = vmatprep.subr.bf16.mxu0 0
    %656 = vmatpush1.bf16.msra.mxu0 %v627
    %657 = vmatprep.subr.bf16.mxu0 0
    %658 = vmatpush1.bf16.msra.mxu0 %v626
    %659 = vmatprep.subr.bf16.mxu0 0
    %660 = vmatpush1.bf16.msra.mxu0 %v625
    %661 = vmatprep.subr.bf16.mxu0 0
    %662 = vmatpush1.bf16.msra.mxu0 %v624
    %663 = vmatprep.subr.bf16.mxu0 0
    %664 = vmatpush1.bf16.msra.mxu0 %v623
    %665 = vmatprep.subr.bf16.mxu0 0
    %666 = vmatpush1.bf16.msra.mxu0 %v622
    %667 = vmatprep.subr.bf16.mxu0 0
    %668 = vmatpush1.bf16.msra.mxu0 %v621
    %669 = vmatprep.subr.bf16.mxu0 0
    %670 = vmatpush2.bf16.msra.mxu0 %v636
    %671 = vmatprep.subr.bf16.mxu0 0
    %672 = vmatpush2.bf16.msra.mxu0 %v635
    %673 = vmatprep.subr.bf16.mxu0 0
    %674 = vmatpush2.bf16.msra.mxu0 %v634
    %675 = vmatprep.subr.bf16.mxu0 0
    %676 = vmatpush2.bf16.msra.mxu0 %v633
    %677 = vmatprep.subr.bf16.mxu0 0
    %678 = vmatpush2.bf16.msra.mxu0 %v632
    %679 = vmatprep.subr.bf16.mxu0 0
    %680 = vmatpush2.bf16.msra.mxu0 %v631
    %681 = vmatprep.subr.bf16.mxu0 0
    %682 = vmatpush2.bf16.msra.mxu0 %v630
    %683 = vmatprep.subr.bf16.mxu0 0
    %684 = vmatpush2.bf16.msra.mxu0 %v629
    %685 = vmatprep.mubr.bf16.mxu0 %v487
    %686 = vmatmul.mubr.bf16.gmra.mxu0 %v486
    %v687 = vpop.f32.mrf.mxu0
    %v688 = vadd.f32 %v555, %v687
    %v689 = vpop.f32.mrf.mxu0
    %v690 = vpop.f32.mrf.mxu0
    %v691 = vadd.f32 %v555, %v690
    %v692 = vpop.f32.mrf.mxu0
    %693 = vmatprep.mubr.bf16.mxu0 %v489
    %694 = vmatmul.mubr.bf16.gmra.mxu0 %v488
    %v695 = vpop.f32.mrf.mxu0
    %v696 = vadd.f32 %v555, %v695
    %v697 = vpop.f32.mrf.mxu0
    %v698 = vpop.f32.mrf.mxu0
    %v699 = vadd.f32 %v555, %v698
    %v700 = vpop.f32.mrf.mxu0
    %701 = vmatprep.mubr.bf16.mxu0 %v491
    %702 = vmatmul.mubr.bf16.gmra.mxu0 %v490
    %v703 = vpop.f32.mrf.mxu0
    %v704 = vadd.f32 %v555, %v703
    %v705 = vpop.f32.mrf.mxu0
    %v706 = vpop.f32.mrf.mxu0
    %v707 = vadd.f32 %v555, %v706
    %v708 = vpop.f32.mrf.mxu0
    %709 = vmatprep.mubr.bf16.mxu0 %v493
    %710 = vmatmul.mubr.bf16.gmra.mxu0 %v492
    %v711 = vpop.f32.mrf.mxu0
    %v712 = vadd.f32 %v555, %v711
    %v713 = vpop.f32.mrf.mxu0
    %v714 = vpop.f32.mrf.mxu0
    %v715 = vadd.f32 %v555, %v714
    %v716 = vpop.f32.mrf.mxu0
    %717 = vmatprep.mubr.bf16.mxu0 %v495
    %718 = vmatmul.mubr.bf16.gmra.mxu0 %v494
    %v719 = vpop.f32.mrf.mxu0
    %v720 = vadd.f32 %v555, %v719
    %v721 = vpop.f32.mrf.mxu0
    %v722 = vpop.f32.mrf.mxu0
    %v723 = vadd.f32 %v555, %v722
    %v724 = vpop.f32.mrf.mxu0
    %725 = vmatprep.mubr.bf16.mxu0 %v497
    %726 = vmatmul.mubr.bf16.gmra.mxu0 %v496
    %v727 = vpop.f32.mrf.mxu0
    %v728 = vadd.f32 %v555, %v727
    %v729 = vpop.f32.mrf.mxu0
    %v730 = vpop.f32.mrf.mxu0
    %v731 = vadd.f32 %v555, %v730
    %v732 = vpop.f32.mrf.mxu0
    %733 = vmatprep.mubr.bf16.mxu0 %v499
    %734 = vmatmul.mubr.bf16.gmra.mxu0 %v498
    %v735 = vpop.f32.mrf.mxu0
    %v736 = vadd.f32 %v555, %v735
    %v737 = vpop.f32.mrf.mxu0
    %v738 = vpop.f32.mrf.mxu0
    %v739 = vadd.f32 %v555, %v738
    %v740 = vpop.f32.mrf.mxu0
    %741 = vmatprep.mubr.bf16.mxu0 %v501
    %742 = vmatmul.mubr.bf16.gmra.mxu0 %v500
    %v743 = vpop.f32.mrf.mxu0
    %v744 = vadd.f32 %v555, %v743
    %v745 = vpop.f32.mrf.mxu0
    %v746 = vpop.f32.mrf.mxu0
    %v747 = vadd.f32 %v555, %v746
    %v748 = vpop.f32.mrf.mxu0
    %749 = vmatprep.mubr.bf16.mxu0 %v503
    %750 = vmatmul.mubr.bf16.gmra.mxu0 %v502
    %v751 = vpop.f32.mrf.mxu0
    %v752 = vadd.f32 %v555, %v751
    %v753 = vpop.f32.mrf.mxu0
    %v754 = vpop.f32.mrf.mxu0
    %v755 = vadd.f32 %v555, %v754
    %v756 = vpop.f32.mrf.mxu0
    %757 = vmatprep.mubr.bf16.mxu0 %v505
    %758 = vmatmul.mubr.bf16.gmra.mxu0 %v504
    %v759 = vpop.f32.mrf.mxu0
    %v760 = vadd.f32 %v555, %v759
    %v761 = vpop.f32.mrf.mxu0
    %v762 = vpop.f32.mrf.mxu0
    %v763 = vadd.f32 %v555, %v762
    %v764 = vpop.f32.mrf.mxu0
    %765 = vmatprep.mubr.bf16.mxu0 %v507
    %766 = vmatmul.mubr.bf16.gmra.mxu0 %v506
    %v767 = vpop.f32.mrf.mxu0
    %v768 = vadd.f32 %v555, %v767
    %v769 = vpop.f32.mrf.mxu0
    %v770 = vpop.f32.mrf.mxu0
    %v771 = vadd.f32 %v555, %v770
    %v772 = vpop.f32.mrf.mxu0
    %773 = vmatprep.mubr.bf16.mxu0 %v509
    %774 = vmatmul.mubr.bf16.gmra.mxu0 %v508
    %v775 = vpop.f32.mrf.mxu0
    %v776 = vadd.f32 %v555, %v775
    %v777 = vpop.f32.mrf.mxu0
    %v778 = vpop.f32.mrf.mxu0
    %v779 = vadd.f32 %v555, %v778
    %v780 = vpop.f32.mrf.mxu0
    %781 = vmatprep.mubr.bf16.mxu0 %v511
    %782 = vmatmul.mubr.bf16.gmra.mxu0 %v510
    %v783 = vpop.f32.mrf.mxu0
    %v784 = vadd.f32 %v555, %v783
    %v785 = vpop.f32.mrf.mxu0
    %v786 = vpop.f32.mrf.mxu0
    %v787 = vadd.f32 %v555, %v786
    %v788 = vpop.f32.mrf.mxu0
    %789 = vmatprep.mubr.bf16.mxu0 %v513
    %790 = vmatmul.mubr.bf16.gmra.mxu0 %v512
    %v791 = vpop.f32.mrf.mxu0
    %v792 = vadd.f32 %v555, %v791
    %v793 = vpop.f32.mrf.mxu0
    %v794 = vpop.f32.mrf.mxu0
    %v795 = vadd.f32 %v555, %v794
    %v796 = vpop.f32.mrf.mxu0
    %797 = vmatprep.mubr.bf16.mxu0 %v515
    %798 = vmatmul.mubr.bf16.gmra.mxu0 %v514
    %v799 = vpop.f32.mrf.mxu0
    %v800 = vadd.f32 %v555, %v799
    %v801 = vpop.f32.mrf.mxu0
    %v802 = vpop.f32.mrf.mxu0
    %v803 = vadd.f32 %v555, %v802
    %v804 = vpop.f32.mrf.mxu0
    %805 = vmatprep.mubr.bf16.mxu0 %v517
    %806 = vmatmul.mubr.bf16.gmra.mxu0 %v516
    %v807 = vpop.f32.mrf.mxu0
    %v808 = vadd.f32 %v555, %v807
    %v809 = vpop.f32.mrf.mxu0
    %v810 = vpop.f32.mrf.mxu0
    %v811 = vadd.f32 %v555, %v810
    %v812 = vpop.f32.mrf.mxu0
    %813 = vdwg.mxu0
    %v814 = vpack.c.bf16 %v691, %v688
    %v815 = vpack.c.bf16 %v699, %v696
    %v816 = vpack.c.bf16 %v707, %v704
    %v817 = vpack.c.bf16 %v715, %v712
    %v818 = vpack.c.bf16 %v723, %v720
    %v819 = vpack.c.bf16 %v731, %v728
    %v820 = vpack.c.bf16 %v739, %v736
    %v821 = vpack.c.bf16 %v747, %v744
    %v822 = vpack.c.bf16 %v755, %v752
    %v823 = vpack.c.bf16 %v763, %v760
    %v824 = vpack.c.bf16 %v771, %v768
    %v825 = vpack.c.bf16 %v779, %v776
    %v826 = vpack.c.bf16 %v787, %v784
    %v827 = vpack.c.bf16 %v795, %v792
    %v828 = vpack.c.bf16 %v803, %v800
    %v829 = vpack.c.bf16 %v811, %v808
    %vm830 = vcmp.gt.bf16.partialorder %v814, 0
    %vm831 = vcmp.gt.bf16.partialorder %v815, 0
    %vm832 = vcmp.gt.bf16.partialorder %v816, 0
    %vm833 = vcmp.gt.bf16.partialorder %v817, 0
    %vm834 = vcmp.gt.bf16.partialorder %v818, 0
    %vm835 = vcmp.gt.bf16.partialorder %v819, 0
    %vm836 = vcmp.gt.bf16.partialorder %v820, 0
    %vm837 = vcmp.gt.bf16.partialorder %v821, 0
    %vm838 = vcmp.gt.bf16.partialorder %v822, 0
    %vm839 = vcmp.gt.bf16.partialorder %v823, 0
    %vm840 = vcmp.gt.bf16.partialorder %v824, 0
    %vm841 = vcmp.gt.bf16.partialorder %v825, 0
    %vm842 = vcmp.gt.bf16.partialorder %v826, 0
    %vm843 = vcmp.gt.bf16.partialorder %v827, 0
    %vm844 = vcmp.gt.bf16.partialorder %v828, 0
    %vm845 = vcmp.gt.bf16.partialorder %v829, 0
    %v846 = vmul.bf16 %v814, 1009007652
    %v847 = vmul.bf16 %v815, 1009007652
    %v848 = vmul.bf16 %v816, 1009007652
    %v849 = vmul.bf16 %v817, 1009007652
    %v850 = vmul.bf16 %v818, 1009007652
    %v851 = vmul.bf16 %v819, 1009007652
    %v852 = vmul.bf16 %v820, 1009007652
    %v853 = vmul.bf16 %v821, 1009007652
    %v854 = vmul.bf16 %v822, 1009007652
    %v855 = vmul.bf16 %v823, 1009007652
    %v856 = vmul.bf16 %v824, 1009007652
    %v857 = vmul.bf16 %v825, 1009007652
    %v858 = vmul.bf16 %v826, 1009007652
    %v859 = vmul.bf16 %v827, 1009007652
    %v860 = vmul.bf16 %v828, 1009007652
    %v861 = vmul.bf16 %v829, 1009007652
    %v862 = vsel %vm830, %v814, %v846
    %v863 = vsel %vm831, %v815, %v847
    %v864 = vsel %vm832, %v816, %v848
    %v865 = vsel %vm833, %v817, %v849
    %v866 = vsel %vm834, %v818, %v850
    %v867 = vsel %vm835, %v819, %v851
    %v868 = vsel %vm836, %v820, %v852
    %v869 = vsel %vm837, %v821, %v853
    %v870 = vsel %vm838, %v822, %v854
    %v871 = vsel %vm839, %v823, %v855
    %v872 = vsel %vm840, %v824, %v856
    %v873 = vsel %vm841, %v825, %v857
    %v874 = vsel %vm842, %v826, %v858
    %v875 = vsel %vm843, %v827, %v859
    %v876 = vsel %vm844, %v828, %v860
    %v877 = vsel %vm845, %v829, %v861
    %v878 = vld [vmem:[%s5] sm:$0xf]
    %v879 = vld [vmem:[%s5 + $0x4] sm:$0xf]
    %v880 = vld [vmem:[%s5 + $0x8] sm:$0xf]
    %v881 = vld [vmem:[%s5 + $0xc] sm:$0xf]
    %v882 = vld [vmem:[%s5 + $0x10] sm:$0xf]
    %v883 = vld [vmem:[%s5 + $0x14] sm:$0xf]
    %v884 = vld [vmem:[%s5 + $0x18] sm:$0xf]
    %v885 = vld [vmem:[%s5 + $0x1c] sm:$0xf]
    %v886 = vld [vmem:[%s5 + $0x20] sm:$0xf]
    %v887 = vld [vmem:[%s5 + $0x24] sm:$0xf]
    %v888 = vld [vmem:[%s5 + $0x28] sm:$0xf]
    %v889 = vld [vmem:[%s5 + $0x2c] sm:$0xf]
    %v890 = vld [vmem:[%s5 + $0x30] sm:$0xf]
    %v891 = vld [vmem:[%s5 + $0x34] sm:$0xf]
    %v892 = vld [vmem:[%s5 + $0x38] sm:$0xf]
    %v893 = vld [vmem:[%s5 + $0x3c] sm:$0xf]
    %v894 = vld [vmem:[%s6] sm:$0x1]
    %v896 = vlaneseq
    %v897 = vshrl.u32 %v896, 7
    %v898 = vsub.s32 0, %v897
    %v899 = vrot.slane %v894, %v898
    %v917 = vunpack.c.l.b16 %v878
    %v918 = vunpack.c.l.b16 %v879
    %v919 = vunpack.c.l.b16 %v880
    %v920 = vunpack.c.l.b16 %v881
    %v921 = vunpack.c.l.b16 %v882
    %v922 = vunpack.c.l.b16 %v883
    %v923 = vunpack.c.l.b16 %v884
    %v924 = vunpack.c.l.b16 %v885
    %v925 = vunpack.c.l.b16 %v886
    %v926 = vunpack.c.l.b16 %v887
    %v927 = vunpack.c.l.b16 %v888
    %v928 = vunpack.c.l.b16 %v889
    %v929 = vunpack.c.l.b16 %v890
    %v930 = vunpack.c.l.b16 %v891
    %v931 = vunpack.c.l.b16 %v892
    %v932 = vunpack.c.l.b16 %v893
    %v933 = vpack.c.b16 %v918, %v917
    %v934 = vpack.c.b16 %v920, %v919
    %v935 = vpack.c.b16 %v922, %v921
    %v936 = vpack.c.b16 %v924, %v923
    %v937 = vpack.c.b16 %v926, %v925
    %v938 = vpack.c.b16 %v928, %v927
    %v939 = vpack.c.b16 %v930, %v929
    %v940 = vpack.c.b16 %v932, %v931
    %949 = vmatprep.subr.bf16.mxu0 0
    %950 = vmatpush1.bf16.msra.mxu0 %v940
    %951 = vmatprep.subr.bf16.mxu0 0
    %952 = vmatpush1.bf16.msra.mxu0 %v939
    %953 = vmatprep.subr.bf16.mxu0 0
    %954 = vmatpush1.bf16.msra.mxu0 %v938
    %955 = vmatprep.subr.bf16.mxu0 0
    %956 = vmatpush1.bf16.msra.mxu0 %v937
    %957 = vmatprep.subr.bf16.mxu0 0
    %958 = vmatpush1.bf16.msra.mxu0 %v936
    %959 = vmatprep.subr.bf16.mxu0 0
    %960 = vmatpush1.bf16.msra.mxu0 %v935
    %961 = vmatprep.subr.bf16.mxu0 0
    %962 = vmatpush1.bf16.msra.mxu0 %v934
    %963 = vmatprep.subr.bf16.mxu0 0
    %964 = vmatpush1.bf16.msra.mxu0 %v933
    %965 = vmatprep.subr.bf16.mxu0 0
    %966 = vmatpush2.bf16.msra.mxu0 0
    %967 = vmatprep.subr.bf16.mxu0 0
    %968 = vmatpush2.bf16.msra.mxu0 0
    %969 = vmatprep.subr.bf16.mxu0 0
    %970 = vmatpush2.bf16.msra.mxu0 0
    %971 = vmatprep.subr.bf16.mxu0 0
    %972 = vmatpush2.bf16.msra.mxu0 0
    %973 = vmatprep.subr.bf16.mxu0 0
    %974 = vmatpush2.bf16.msra.mxu0 0
    %975 = vmatprep.subr.bf16.mxu0 0
    %976 = vmatpush2.bf16.msra.mxu0 0
    %977 = vmatprep.subr.bf16.mxu0 0
    %978 = vmatpush2.bf16.msra.mxu0 0
    %979 = vmatprep.subr.bf16.mxu0 0
    %980 = vmatpush2.bf16.msra.mxu0 0
    %981 = vmatprep.mubr.bf16.mxu0 0
    %982 = vmatmul.mubr.bf16.gmra.mxu0 %v862
    %v983 = vpop.f32.mrf.mxu0
    %v984 = vadd.f32 %v899, %v983
    %v985 = vpop.f32.mrf.mxu0
    %v986 = vpop.f32.mrf.mxu0
    %v987 = vadd.f32 %v899, %v986
    %v988 = vpop.f32.mrf.mxu0
    %989 = vmatprep.mubr.bf16.mxu0 0
    %990 = vmatmul.mubr.bf16.gmra.mxu0 %v863
    %v991 = vpop.f32.mrf.mxu0
    %v992 = vadd.f32 %v899, %v991
    %v993 = vpop.f32.mrf.mxu0
    %v994 = vpop.f32.mrf.mxu0
    %v995 = vadd.f32 %v899, %v994
    %v996 = vpop.f32.mrf.mxu0
    %997 = vmatprep.mubr.bf16.mxu0 0
    %998 = vmatmul.mubr.bf16.gmra.mxu0 %v864
    %v999 = vpop.f32.mrf.mxu0
    %v1000 = vadd.f32 %v899, %v999
    %v1001 = vpop.f32.mrf.mxu0
    %v1002 = vpop.f32.mrf.mxu0
    %v1003 = vadd.f32 %v899, %v1002
    %v1004 = vpop.f32.mrf.mxu0
    %1005 = vmatprep.mubr.bf16.mxu0 0
    %1006 = vmatmul.mubr.bf16.gmra.mxu0 %v865
    %v1007 = vpop.f32.mrf.mxu0
    %v1008 = vadd.f32 %v899, %v1007
    %v1009 = vpop.f32.mrf.mxu0
    %v1010 = vpop.f32.mrf.mxu0
    %v1011 = vadd.f32 %v899, %v1010
    %v1012 = vpop.f32.mrf.mxu0
    %1013 = vmatprep.mubr.bf16.mxu0 0
    %1014 = vmatmul.mubr.bf16.gmra.mxu0 %v866
    %v1015 = vpop.f32.mrf.mxu0
    %v1016 = vadd.f32 %v899, %v1015
    %v1017 = vpop.f32.mrf.mxu0
    %v1018 = vpop.f32.mrf.mxu0
    %v1019 = vadd.f32 %v899, %v1018
    %v1020 = vpop.f32.mrf.mxu0
    %1021 = vmatprep.mubr.bf16.mxu0 0
    %1022 = vmatmul.mubr.bf16.gmra.mxu0 %v867
    %v1023 = vpop.f32.mrf.mxu0
    %v1024 = vadd.f32 %v899, %v1023
    %v1025 = vpop.f32.mrf.mxu0
    %v1026 = vpop.f32.mrf.mxu0
    %v1027 = vadd.f32 %v899, %v1026
    %v1028 = vpop.f32.mrf.mxu0
    %1029 = vmatprep.mubr.bf16.mxu0 0
    %1030 = vmatmul.mubr.bf16.gmra.mxu0 %v868
    %v1031 = vpop.f32.mrf.mxu0
    %v1032 = vadd.f32 %v899, %v1031
    %v1033 = vpop.f32.mrf.mxu0
    %v1034 = vpop.f32.mrf.mxu0
    %v1035 = vadd.f32 %v899, %v1034
    %v1036 = vpop.f32.mrf.mxu0
    %1037 = vmatprep.mubr.bf16.mxu0 0
    %1038 = vmatmul.mubr.bf16.gmra.mxu0 %v869
    %v1039 = vpop.f32.mrf.mxu0
    %v1040 = vadd.f32 %v899, %v1039
    %v1041 = vpop.f32.mrf.mxu0
    %v1042 = vpop.f32.mrf.mxu0
    %v1043 = vadd.f32 %v899, %v1042
    %v1044 = vpop.f32.mrf.mxu0
    %1045 = vmatprep.mubr.bf16.mxu0 0
    %1046 = vmatmul.mubr.bf16.gmra.mxu0 %v870
    %v1047 = vpop.f32.mrf.mxu0
    %v1048 = vadd.f32 %v899, %v1047
    %v1049 = vpop.f32.mrf.mxu0
    %v1050 = vpop.f32.mrf.mxu0
    %v1051 = vadd.f32 %v899, %v1050
    %v1052 = vpop.f32.mrf.mxu0
    %1053 = vmatprep.mubr.bf16.mxu0 0
    %1054 = vmatmul.mubr.bf16.gmra.mxu0 %v871
    %v1055 = vpop.f32.mrf.mxu0
    %v1056 = vadd.f32 %v899, %v1055
    %v1057 = vpop.f32.mrf.mxu0
    %v1058 = vpop.f32.mrf.mxu0
    %v1059 = vadd.f32 %v899, %v1058
    %v1060 = vpop.f32.mrf.mxu0
    %1061 = vmatprep.mubr.bf16.mxu0 0
    %1062 = vmatmul.mubr.bf16.gmra.mxu0 %v872
    %v1063 = vpop.f32.mrf.mxu0
    %v1064 = vadd.f32 %v899, %v1063
    %v1065 = vpop.f32.mrf.mxu0
    %v1066 = vpop.f32.mrf.mxu0
    %v1067 = vadd.f32 %v899, %v1066
    %v1068 = vpop.f32.mrf.mxu0
    %1069 = vmatprep.mubr.bf16.mxu0 0
    %1070 = vmatmul.mubr.bf16.gmra.mxu0 %v873
    %v1071 = vpop.f32.mrf.mxu0
    %v1072 = vadd.f32 %v899, %v1071
    %v1073 = vpop.f32.mrf.mxu0
    %v1074 = vpop.f32.mrf.mxu0
    %v1075 = vadd.f32 %v899, %v1074
    %v1076 = vpop.f32.mrf.mxu0
    %1077 = vmatprep.mubr.bf16.mxu0 0
    %1078 = vmatmul.mubr.bf16.gmra.mxu0 %v874
    %v1079 = vpop.f32.mrf.mxu0
    %v1080 = vadd.f32 %v899, %v1079
    %v1081 = vpop.f32.mrf.mxu0
    %v1082 = vpop.f32.mrf.mxu0
    %v1083 = vadd.f32 %v899, %v1082
    %v1084 = vpop.f32.mrf.mxu0
    %1085 = vmatprep.mubr.bf16.mxu0 0
    %1086 = vmatmul.mubr.bf16.gmra.mxu0 %v875
    %v1087 = vpop.f32.mrf.mxu0
    %v1088 = vadd.f32 %v899, %v1087
    %v1089 = vpop.f32.mrf.mxu0
    %v1090 = vpop.f32.mrf.mxu0
    %v1091 = vadd.f32 %v899, %v1090
    %v1092 = vpop.f32.mrf.mxu0
    %1093 = vmatprep.mubr.bf16.mxu0 0
    %1094 = vmatmul.mubr.bf16.gmra.mxu0 %v876
    %v1095 = vpop.f32.mrf.mxu0
    %v1096 = vadd.f32 %v899, %v1095
    %v1097 = vpop.f32.mrf.mxu0
    %v1098 = vpop.f32.mrf.mxu0
    %v1099 = vadd.f32 %v899, %v1098
    %v1100 = vpop.f32.mrf.mxu0
    %1101 = vmatprep.mubr.bf16.mxu0 0
    %1102 = vmatmul.mubr.bf16.gmra.mxu0 %v877
    %v1103 = vpop.f32.mrf.mxu0
    %v1104 = vadd.f32 %v899, %v1103
    %v1105 = vpop.f32.mrf.mxu0
    %v1106 = vpop.f32.mrf.mxu0
    %v1107 = vadd.f32 %v899, %v1106
    %v1108 = vpop.f32.mrf.mxu0
    %1109 = vdwg.mxu0
    %v1110 = vpack.c.bf16 %v987, %v984
    %v1111 = vpack.c.bf16 %v995, %v992
    %v1112 = vpack.c.bf16 %v1003, %v1000
    %v1113 = vpack.c.bf16 %v1011, %v1008
    %v1114 = vpack.c.bf16 %v1019, %v1016
    %v1115 = vpack.c.bf16 %v1027, %v1024
    %v1116 = vpack.c.bf16 %v1035, %v1032
    %v1117 = vpack.c.bf16 %v1043, %v1040
    %v1118 = vpack.c.bf16 %v1051, %v1048
    %v1119 = vpack.c.bf16 %v1059, %v1056
    %v1120 = vpack.c.bf16 %v1067, %v1064
    %v1121 = vpack.c.bf16 %v1075, %v1072
    %v1122 = vpack.c.bf16 %v1083, %v1080
    %v1123 = vpack.c.bf16 %v1091, %v1088
    %v1124 = vpack.c.bf16 %v1099, %v1096
    %v1125 = vpack.c.bf16 %v1107, %v1104
    %vm1126 = vcmp.gt.bf16.partialorder %v1110, 0
    %vm1127 = vcmp.gt.bf16.partialorder %v1111, 0
    %vm1128 = vcmp.gt.bf16.partialorder %v1112, 0
    %vm1129 = vcmp.gt.bf16.partialorder %v1113, 0
    %vm1130 = vcmp.gt.bf16.partialorder %v1114, 0
    %vm1131 = vcmp.gt.bf16.partialorder %v1115, 0
    %vm1132 = vcmp.gt.bf16.partialorder %v1116, 0
    %vm1133 = vcmp.gt.bf16.partialorder %v1117, 0
    %vm1134 = vcmp.gt.bf16.partialorder %v1118, 0
    %vm1135 = vcmp.gt.bf16.partialorder %v1119, 0
    %vm1136 = vcmp.gt.bf16.partialorder %v1120, 0
    %vm1137 = vcmp.gt.bf16.partialorder %v1121, 0
    %vm1138 = vcmp.gt.bf16.partialorder %v1122, 0
    %vm1139 = vcmp.gt.bf16.partialorder %v1123, 0
    %vm1140 = vcmp.gt.bf16.partialorder %v1124, 0
    %vm1141 = vcmp.gt.bf16.partialorder %v1125, 0
    %v1142 = vmul.bf16 %v1110, 1009007652
    %v1143 = vmul.bf16 %v1111, 1009007652
    %v1144 = vmul.bf16 %v1112, 1009007652
    %v1145 = vmul.bf16 %v1113, 1009007652
    %v1146 = vmul.bf16 %v1114, 1009007652
    %v1147 = vmul.bf16 %v1115, 1009007652
    %v1148 = vmul.bf16 %v1116, 1009007652
    %v1149 = vmul.bf16 %v1117, 1009007652
    %v1150 = vmul.bf16 %v1118, 1009007652
    %v1151 = vmul.bf16 %v1119, 1009007652
    %v1152 = vmul.bf16 %v1120, 1009007652
    %v1153 = vmul.bf16 %v1121, 1009007652
    %v1154 = vmul.bf16 %v1122, 1009007652
    %v1155 = vmul.bf16 %v1123, 1009007652
    %v1156 = vmul.bf16 %v1124, 1009007652
    %v1157 = vmul.bf16 %v1125, 1009007652
    %v1158 = vsel %vm1126, %v1110, %v1142
    %v1159 = vsel %vm1127, %v1111, %v1143
    %v1160 = vsel %vm1128, %v1112, %v1144
    %v1161 = vsel %vm1129, %v1113, %v1145
    %v1162 = vsel %vm1130, %v1114, %v1146
    %v1163 = vsel %vm1131, %v1115, %v1147
    %v1164 = vsel %vm1132, %v1116, %v1148
    %v1165 = vsel %vm1133, %v1117, %v1149
    %v1166 = vsel %vm1134, %v1118, %v1150
    %v1167 = vsel %vm1135, %v1119, %v1151
    %v1168 = vsel %vm1136, %v1120, %v1152
    %v1169 = vsel %vm1137, %v1121, %v1153
    %v1170 = vsel %vm1138, %v1122, %v1154
    %v1171 = vsel %vm1139, %v1123, %v1155
    %v1172 = vsel %vm1140, %v1124, %v1156
    %v1173 = vsel %vm1141, %v1125, %v1157
    %v1174 = vld [vmem:[%s7] sm:$0xf]
    %v1175 = vld [vmem:[%s7 + $0x4] sm:$0xf]
    %v1176 = vld [vmem:[%s7 + $0x8] sm:$0xf]
    %v1177 = vld [vmem:[%s7 + $0xc] sm:$0xf]
    %v1178 = vld [vmem:[%s7 + $0x10] sm:$0xf]
    %v1179 = vld [vmem:[%s7 + $0x14] sm:$0xf]
    %v1180 = vld [vmem:[%s7 + $0x18] sm:$0xf]
    %v1181 = vld [vmem:[%s7 + $0x1c] sm:$0xf]
    %v1182 = vld [vmem:[%s7 + $0x20] sm:$0xf]
    %v1183 = vld [vmem:[%s7 + $0x24] sm:$0xf]
    %v1184 = vld [vmem:[%s7 + $0x28] sm:$0xf]
    %v1185 = vld [vmem:[%s7 + $0x2c] sm:$0xf]
    %v1186 = vld [vmem:[%s7 + $0x30] sm:$0xf]
    %v1187 = vld [vmem:[%s7 + $0x34] sm:$0xf]
    %v1188 = vld [vmem:[%s7 + $0x38] sm:$0xf]
    %v1189 = vld [vmem:[%s7 + $0x3c] sm:$0xf]
    %v1190 = vld [vmem:[%s8] sm:$0x1]
    %v1192 = vlaneseq
    %v1193 = vshrl.u32 %v1192, 7
    %v1194 = vsub.s32 0, %v1193
    %v1195 = vrot.slane %v1190, %v1194
    %v1213 = vunpack.c.l.b16 %v1174
    %v1214 = vunpack.c.l.b16 %v1175
    %v1215 = vunpack.c.l.b16 %v1176
    %v1216 = vunpack.c.l.b16 %v1177
    %v1217 = vunpack.c.l.b16 %v1178
    %v1218 = vunpack.c.l.b16 %v1179
    %v1219 = vunpack.c.l.b16 %v1180
    %v1220 = vunpack.c.l.b16 %v1181
    %v1221 = vunpack.c.l.b16 %v1182
    %v1222 = vunpack.c.l.b16 %v1183
    %v1223 = vunpack.c.l.b16 %v1184
    %v1224 = vunpack.c.l.b16 %v1185
    %v1225 = vunpack.c.l.b16 %v1186
    %v1226 = vunpack.c.l.b16 %v1187
    %v1227 = vunpack.c.l.b16 %v1188
    %v1228 = vunpack.c.l.b16 %v1189
    %v1229 = vpack.c.b16 %v1214, %v1213
    %v1230 = vpack.c.b16 %v1216, %v1215
    %v1231 = vpack.c.b16 %v1218, %v1217
    %v1232 = vpack.c.b16 %v1220, %v1219
    %v1233 = vpack.c.b16 %v1222, %v1221
    %v1234 = vpack.c.b16 %v1224, %v1223
    %v1235 = vpack.c.b16 %v1226, %v1225
    %v1236 = vpack.c.b16 %v1228, %v1227
    %1245 = vmatprep.subr.bf16.mxu0 0
    %1246 = vmatpush1.bf16.msra.mxu0 %v1236
    %1247 = vmatprep.subr.bf16.mxu0 0
    %1248 = vmatpush1.bf16.msra.mxu0 %v1235
    %1249 = vmatprep.subr.bf16.mxu0 0
    %1250 = vmatpush1.bf16.msra.mxu0 %v1234
    %1251 = vmatprep.subr.bf16.mxu0 0
    %1252 = vmatpush1.bf16.msra.mxu0 %v1233
    %1253 = vmatprep.subr.bf16.mxu0 0
    %1254 = vmatpush1.bf16.msra.mxu0 %v1232
    %1255 = vmatprep.subr.bf16.mxu0 0
    %1256 = vmatpush1.bf16.msra.mxu0 %v1231
    %1257 = vmatprep.subr.bf16.mxu0 0
    %1258 = vmatpush1.bf16.msra.mxu0 %v1230
    %1259 = vmatprep.subr.bf16.mxu0 0
    %1260 = vmatpush1.bf16.msra.mxu0 %v1229
    %1261 = vmatprep.subr.bf16.mxu0 0
    %1262 = vmatpush2.bf16.msra.mxu0 0
    %1263 = vmatprep.subr.bf16.mxu0 0
    %1264 = vmatpush2.bf16.msra.mxu0 0
    %1265 = vmatprep.subr.bf16.mxu0 0
    %1266 = vmatpush2.bf16.msra.mxu0 0
    %1267 = vmatprep.subr.bf16.mxu0 0
    %1268 = vmatpush2.bf16.msra.mxu0 0
    %1269 = vmatprep.subr.bf16.mxu0 0
    %1270 = vmatpush2.bf16.msra.mxu0 0
    %1271 = vmatprep.subr.bf16.mxu0 0
    %1272 = vmatpush2.bf16.msra.mxu0 0
    %1273 = vmatprep.subr.bf16.mxu0 0
    %1274 = vmatpush2.bf16.msra.mxu0 0
    %1275 = vmatprep.subr.bf16.mxu0 0
    %1276 = vmatpush2.bf16.msra.mxu0 0
    %1277 = vmatprep.mubr.bf16.mxu0 0
    %1278 = vmatmul.mubr.bf16.gmra.mxu0 %v1158
    %v1279 = vpop.f32.mrf.mxu0
    %v1280 = vadd.f32 %v1195, %v1279
    %v1281 = vpop.f32.mrf.mxu0
    %v1282 = vpop.f32.mrf.mxu0
    %v1283 = vadd.f32 %v1195, %v1282
    %v1284 = vpop.f32.mrf.mxu0
    %1285 = vmatprep.mubr.bf16.mxu0 0
    %1286 = vmatmul.mubr.bf16.gmra.mxu0 %v1159
    %v1287 = vpop.f32.mrf.mxu0
    %v1288 = vadd.f32 %v1195, %v1287
    %v1289 = vpop.f32.mrf.mxu0
    %v1290 = vpop.f32.mrf.mxu0
    %v1291 = vadd.f32 %v1195, %v1290
    %v1292 = vpop.f32.mrf.mxu0
    %1293 = vmatprep.mubr.bf16.mxu0 0
    %1294 = vmatmul.mubr.bf16.gmra.mxu0 %v1160
    %v1295 = vpop.f32.mrf.mxu0
    %v1296 = vadd.f32 %v1195, %v1295
    %v1297 = vpop.f32.mrf.mxu0
    %v1298 = vpop.f32.mrf.mxu0
    %v1299 = vadd.f32 %v1195, %v1298
    %v1300 = vpop.f32.mrf.mxu0
    %1301 = vmatprep.mubr.bf16.mxu0 0
    %1302 = vmatmul.mubr.bf16.gmra.mxu0 %v1161
    %v1303 = vpop.f32.mrf.mxu0
    %v1304 = vadd.f32 %v1195, %v1303
    %v1305 = vpop.f32.mrf.mxu0
    %v1306 = vpop.f32.mrf.mxu0
    %v1307 = vadd.f32 %v1195, %v1306
    %v1308 = vpop.f32.mrf.mxu0
    %1309 = vmatprep.mubr.bf16.mxu0 0
    %1310 = vmatmul.mubr.bf16.gmra.mxu0 %v1162
    %v1311 = vpop.f32.mrf.mxu0
    %v1312 = vadd.f32 %v1195, %v1311
    %v1313 = vpop.f32.mrf.mxu0
    %v1314 = vpop.f32.mrf.mxu0
    %v1315 = vadd.f32 %v1195, %v1314
    %v1316 = vpop.f32.mrf.mxu0
    %1317 = vmatprep.mubr.bf16.mxu0 0
    %1318 = vmatmul.mubr.bf16.gmra.mxu0 %v1163
    %v1319 = vpop.f32.mrf.mxu0
    %v1320 = vadd.f32 %v1195, %v1319
    %v1321 = vpop.f32.mrf.mxu0
    %v1322 = vpop.f32.mrf.mxu0
    %v1323 = vadd.f32 %v1195, %v1322
    %v1324 = vpop.f32.mrf.mxu0
    %1325 = vmatprep.mubr.bf16.mxu0 0
    %1326 = vmatmul.mubr.bf16.gmra.mxu0 %v1164
    %v1327 = vpop.f32.mrf.mxu0
    %v1328 = vadd.f32 %v1195, %v1327
    %v1329 = vpop.f32.mrf.mxu0
    %v1330 = vpop.f32.mrf.mxu0
    %v1331 = vadd.f32 %v1195, %v1330
    %v1332 = vpop.f32.mrf.mxu0
    %1333 = vmatprep.mubr.bf16.mxu0 0
    %1334 = vmatmul.mubr.bf16.gmra.mxu0 %v1165
    %v1335 = vpop.f32.mrf.mxu0
    %v1336 = vadd.f32 %v1195, %v1335
    %v1337 = vpop.f32.mrf.mxu0
    %v1338 = vpop.f32.mrf.mxu0
    %v1339 = vadd.f32 %v1195, %v1338
    %v1340 = vpop.f32.mrf.mxu0
    %1341 = vmatprep.mubr.bf16.mxu0 0
    %1342 = vmatmul.mubr.bf16.gmra.mxu0 %v1166
    %v1343 = vpop.f32.mrf.mxu0
    %v1344 = vadd.f32 %v1195, %v1343
    %v1345 = vpop.f32.mrf.mxu0
    %v1346 = vpop.f32.mrf.mxu0
    %v1347 = vadd.f32 %v1195, %v1346
    %v1348 = vpop.f32.mrf.mxu0
    %1349 = vmatprep.mubr.bf16.mxu0 0
    %1350 = vmatmul.mubr.bf16.gmra.mxu0 %v1167
    %v1351 = vpop.f32.mrf.mxu0
    %v1352 = vadd.f32 %v1195, %v1351
    %v1353 = vpop.f32.mrf.mxu0
    %v1354 = vpop.f32.mrf.mxu0
    %v1355 = vadd.f32 %v1195, %v1354
    %v1356 = vpop.f32.mrf.mxu0
    %1357 = vmatprep.mubr.bf16.mxu0 0
    %1358 = vmatmul.mubr.bf16.gmra.mxu0 %v1168
    %v1359 = vpop.f32.mrf.mxu0
    %v1360 = vadd.f32 %v1195, %v1359
    %v1361 = vpop.f32.mrf.mxu0
    %v1362 = vpop.f32.mrf.mxu0
    %v1363 = vadd.f32 %v1195, %v1362
    %v1364 = vpop.f32.mrf.mxu0
    %1365 = vmatprep.mubr.bf16.mxu0 0
    %1366 = vmatmul.mubr.bf16.gmra.mxu0 %v1169
    %v1367 = vpop.f32.mrf.mxu0
    %v1368 = vadd.f32 %v1195, %v1367
    %v1369 = vpop.f32.mrf.mxu0
    %v1370 = vpop.f32.mrf.mxu0
    %v1371 = vadd.f32 %v1195, %v1370
    %v1372 = vpop.f32.mrf.mxu0
    %1373 = vmatprep.mubr.bf16.mxu0 0
    %1374 = vmatmul.mubr.bf16.gmra.mxu0 %v1170
    %v1375 = vpop.f32.mrf.mxu0
    %v1376 = vadd.f32 %v1195, %v1375
    %v1377 = vpop.f32.mrf.mxu0
    %v1378 = vpop.f32.mrf.mxu0
    %v1379 = vadd.f32 %v1195, %v1378
    %v1380 = vpop.f32.mrf.mxu0
    %1381 = vmatprep.mubr.bf16.mxu0 0
    %1382 = vmatmul.mubr.bf16.gmra.mxu0 %v1171
    %v1383 = vpop.f32.mrf.mxu0
    %v1384 = vadd.f32 %v1195, %v1383
    %v1385 = vpop.f32.mrf.mxu0
    %v1386 = vpop.f32.mrf.mxu0
    %v1387 = vadd.f32 %v1195, %v1386
    %v1388 = vpop.f32.mrf.mxu0
    %1389 = vmatprep.mubr.bf16.mxu0 0
    %1390 = vmatmul.mubr.bf16.gmra.mxu0 %v1172
    %v1391 = vpop.f32.mrf.mxu0
    %v1392 = vadd.f32 %v1195, %v1391
    %v1393 = vpop.f32.mrf.mxu0
    %v1394 = vpop.f32.mrf.mxu0
    %v1395 = vadd.f32 %v1195, %v1394
    %v1396 = vpop.f32.mrf.mxu0
    %1397 = vmatprep.mubr.bf16.mxu0 0
    %1398 = vmatmul.mubr.bf16.gmra.mxu0 %v1173
    %v1399 = vpop.f32.mrf.mxu0
    %v1400 = vadd.f32 %v1195, %v1399
    %v1401 = vpop.f32.mrf.mxu0
    %v1402 = vpop.f32.mrf.mxu0
    %v1403 = vadd.f32 %v1195, %v1402
    %v1404 = vpop.f32.mrf.mxu0
    %1405 = vdwg.mxu0
    %v1406 = vpack.c.bf16 %v1283, %v1280
    %v1407 = vpack.c.bf16 %v1291, %v1288
    %v1408 = vpack.c.bf16 %v1299, %v1296
    %v1409 = vpack.c.bf16 %v1307, %v1304
    %v1410 = vpack.c.bf16 %v1315, %v1312
    %v1411 = vpack.c.bf16 %v1323, %v1320
    %v1412 = vpack.c.bf16 %v1331, %v1328
    %v1413 = vpack.c.bf16 %v1339, %v1336
    %v1414 = vpack.c.bf16 %v1347, %v1344
    %v1415 = vpack.c.bf16 %v1355, %v1352
    %v1416 = vpack.c.bf16 %v1363, %v1360
    %v1417 = vpack.c.bf16 %v1371, %v1368
    %v1418 = vpack.c.bf16 %v1379, %v1376
    %v1419 = vpack.c.bf16 %v1387, %v1384
    %v1420 = vpack.c.bf16 %v1395, %v1392
    %v1421 = vpack.c.bf16 %v1403, %v1400
    %vm1422 = vcmp.gt.bf16.partialorder %v1406, 0
    %vm1423 = vcmp.gt.bf16.partialorder %v1407, 0
    %vm1424 = vcmp.gt.bf16.partialorder %v1408, 0
    %vm1425 = vcmp.gt.bf16.partialorder %v1409, 0
    %vm1426 = vcmp.gt.bf16.partialorder %v1410, 0
    %vm1427 = vcmp.gt.bf16.partialorder %v1411, 0
    %vm1428 = vcmp.gt.bf16.partialorder %v1412, 0
    %vm1429 = vcmp.gt.bf16.partialorder %v1413, 0
    %vm1430 = vcmp.gt.bf16.partialorder %v1414, 0
    %vm1431 = vcmp.gt.bf16.partialorder %v1415, 0
    %vm1432 = vcmp.gt.bf16.partialorder %v1416, 0
    %vm1433 = vcmp.gt.bf16.partialorder %v1417, 0
    %vm1434 = vcmp.gt.bf16.partialorder %v1418, 0
    %vm1435 = vcmp.gt.bf16.partialorder %v1419, 0
    %vm1436 = vcmp.gt.bf16.partialorder %v1420, 0
    %vm1437 = vcmp.gt.bf16.partialorder %v1421, 0
    %v1438 = vmul.bf16 %v1406, 1009007652
    %v1439 = vmul.bf16 %v1407, 1009007652
    %v1440 = vmul.bf16 %v1408, 1009007652
    %v1441 = vmul.bf16 %v1409, 1009007652
    %v1442 = vmul.bf16 %v1410, 1009007652
    %v1443 = vmul.bf16 %v1411, 1009007652
    %v1444 = vmul.bf16 %v1412, 1009007652
    %v1445 = vmul.bf16 %v1413, 1009007652
    %v1446 = vmul.bf16 %v1414, 1009007652
    %v1447 = vmul.bf16 %v1415, 1009007652
    %v1448 = vmul.bf16 %v1416, 1009007652
    %v1449 = vmul.bf16 %v1417, 1009007652
    %v1450 = vmul.bf16 %v1418, 1009007652
    %v1451 = vmul.bf16 %v1419, 1009007652
    %v1452 = vmul.bf16 %v1420, 1009007652
    %v1453 = vmul.bf16 %v1421, 1009007652
    %v1454 = vsel %vm1422, %v1406, %v1438
    %v1455 = vsel %vm1423, %v1407, %v1439
    %v1456 = vsel %vm1424, %v1408, %v1440
    %v1457 = vsel %vm1425, %v1409, %v1441
    %v1458 = vsel %vm1426, %v1410, %v1442
    %v1459 = vsel %vm1427, %v1411, %v1443
    %v1460 = vsel %vm1428, %v1412, %v1444
    %v1461 = vsel %vm1429, %v1413, %v1445
    %v1462 = vsel %vm1430, %v1414, %v1446
    %v1463 = vsel %vm1431, %v1415, %v1447
    %v1464 = vsel %vm1432, %v1416, %v1448
    %v1465 = vsel %vm1433, %v1417, %v1449
    %v1466 = vsel %vm1434, %v1418, %v1450
    %v1467 = vsel %vm1435, %v1419, %v1451
    %v1468 = vsel %vm1436, %v1420, %v1452
    %v1469 = vsel %vm1437, %v1421, %v1453
    %v1470 = vld [vmem:[%s9] sm:$0xf]
    %v1471 = vld [vmem:[%s9 + $0x4] sm:$0xf]
    %v1472 = vld [vmem:[%s9 + $0x8] sm:$0xf]
    %v1473 = vld [vmem:[%s9 + $0xc] sm:$0xf]
    %v1474 = vld [vmem:[%s9 + $0x10] sm:$0xf]
    %v1475 = vld [vmem:[%s9 + $0x14] sm:$0xf]
    %v1476 = vld [vmem:[%s9 + $0x18] sm:$0xf]
    %v1477 = vld [vmem:[%s9 + $0x1c] sm:$0xf]
    %v1478 = vld [vmem:[%s9 + $0x20] sm:$0xf]
    %v1479 = vld [vmem:[%s9 + $0x24] sm:$0xf]
    %v1480 = vld [vmem:[%s9 + $0x28] sm:$0xf]
    %v1481 = vld [vmem:[%s9 + $0x2c] sm:$0xf]
    %v1482 = vld [vmem:[%s9 + $0x30] sm:$0xf]
    %v1483 = vld [vmem:[%s9 + $0x34] sm:$0xf]
    %v1484 = vld [vmem:[%s9 + $0x38] sm:$0xf]
    %v1485 = vld [vmem:[%s9 + $0x3c] sm:$0xf]
    %v1486 = vld [vmem:[%s10] sm:$0x1]
    %v1488 = vlaneseq
    %v1489 = vshrl.u32 %v1488, 7
    %v1490 = vsub.s32 0, %v1489
    %v1491 = vrot.slane %v1486, %v1490
    %v1509 = vunpack.c.l.b16 %v1470
    %v1510 = vunpack.c.l.b16 %v1471
    %v1511 = vunpack.c.l.b16 %v1472
    %v1512 = vunpack.c.l.b16 %v1473
    %v1513 = vunpack.c.l.b16 %v1474
    %v1514 = vunpack.c.l.b16 %v1475
    %v1515 = vunpack.c.l.b16 %v1476
    %v1516 = vunpack.c.l.b16 %v1477
    %v1517 = vunpack.c.l.b16 %v1478
    %v1518 = vunpack.c.l.b16 %v1479
    %v1519 = vunpack.c.l.b16 %v1480
    %v1520 = vunpack.c.l.b16 %v1481
    %v1521 = vunpack.c.l.b16 %v1482
    %v1522 = vunpack.c.l.b16 %v1483
    %v1523 = vunpack.c.l.b16 %v1484
    %v1524 = vunpack.c.l.b16 %v1485
    %v1525 = vpack.c.b16 %v1510, %v1509
    %v1526 = vpack.c.b16 %v1512, %v1511
    %v1527 = vpack.c.b16 %v1514, %v1513
    %v1528 = vpack.c.b16 %v1516, %v1515
    %v1529 = vpack.c.b16 %v1518, %v1517
    %v1530 = vpack.c.b16 %v1520, %v1519
    %v1531 = vpack.c.b16 %v1522, %v1521
    %v1532 = vpack.c.b16 %v1524, %v1523
    %1541 = vmatprep.subr.bf16.mxu0 0
    %1542 = vmatpush1.bf16.msra.mxu0 %v1532
    %1543 = vmatprep.subr.bf16.mxu0 0
    %1544 = vmatpush1.bf16.msra.mxu0 %v1531
    %1545 = vmatprep.subr.bf16.mxu0 0
    %1546 = vmatpush1.bf16.msra.mxu0 %v1530
    %1547 = vmatprep.subr.bf16.mxu0 0
    %1548 = vmatpush1.bf16.msra.mxu0 %v1529
    %1549 = vmatprep.subr.bf16.mxu0 0
    %1550 = vmatpush1.bf16.msra.mxu0 %v1528
    %1551 = vmatprep.subr.bf16.mxu0 0
    %1552 = vmatpush1.bf16.msra.mxu0 %v1527
    %1553 = vmatprep.subr.bf16.mxu0 0
    %1554 = vmatpush1.bf16.msra.mxu0 %v1526
    %1555 = vmatprep.subr.bf16.mxu0 0
    %1556 = vmatpush1.bf16.msra.mxu0 %v1525
    %1557 = vmatprep.subr.bf16.mxu0 0
    %1558 = vmatpush2.bf16.msra.mxu0 0
    %1559 = vmatprep.subr.bf16.mxu0 0
    %1560 = vmatpush2.bf16.msra.mxu0 0
    %1561 = vmatprep.subr.bf16.mxu0 0
    %1562 = vmatpush2.bf16.msra.mxu0 0
    %1563 = vmatprep.subr.bf16.mxu0 0
    %1564 = vmatpush2.bf16.msra.mxu0 0
    %1565 = vmatprep.subr.bf16.mxu0 0
    %1566 = vmatpush2.bf16.msra.mxu0 0
    %1567 = vmatprep.subr.bf16.mxu0 0
    %1568 = vmatpush2.bf16.msra.mxu0 0
    %1569 = vmatprep.subr.bf16.mxu0 0
    %1570 = vmatpush2.bf16.msra.mxu0 0
    %1571 = vmatprep.subr.bf16.mxu0 0
    %1572 = vmatpush2.bf16.msra.mxu0 0
    %1573 = vmatprep.mubr.bf16.mxu0 0
    %1574 = vmatmul.mubr.bf16.gmra.mxu0 %v1454
    %v1575 = vpop.f32.mrf.mxu0
    %v1576 = vadd.f32 %v1491, %v1575
    %v1577 = vpop.f32.mrf.mxu0
    %v1578 = vpop.f32.mrf.mxu0
    %v1579 = vadd.f32 %v1491, %v1578
    %v1580 = vpop.f32.mrf.mxu0
    %1581 = vmatprep.mubr.bf16.mxu0 0
    %1582 = vmatmul.mubr.bf16.gmra.mxu0 %v1455
    %v1583 = vpop.f32.mrf.mxu0
    %v1584 = vadd.f32 %v1491, %v1583
    %v1585 = vpop.f32.mrf.mxu0
    %v1586 = vpop.f32.mrf.mxu0
    %v1587 = vadd.f32 %v1491, %v1586
    %v1588 = vpop.f32.mrf.mxu0
    %1589 = vmatprep.mubr.bf16.mxu0 0
    %1590 = vmatmul.mubr.bf16.gmra.mxu0 %v1456
    %v1591 = vpop.f32.mrf.mxu0
    %v1592 = vadd.f32 %v1491, %v1591
    %v1593 = vpop.f32.mrf.mxu0
    %v1594 = vpop.f32.mrf.mxu0
    %v1595 = vadd.f32 %v1491, %v1594
    %v1596 = vpop.f32.mrf.mxu0
    %1597 = vmatprep.mubr.bf16.mxu0 0
    %1598 = vmatmul.mubr.bf16.gmra.mxu0 %v1457
    %v1599 = vpop.f32.mrf.mxu0
    %v1600 = vadd.f32 %v1491, %v1599
    %v1601 = vpop.f32.mrf.mxu0
    %v1602 = vpop.f32.mrf.mxu0
    %v1603 = vadd.f32 %v1491, %v1602
    %v1604 = vpop.f32.mrf.mxu0
    %1605 = vmatprep.mubr.bf16.mxu0 0
    %1606 = vmatmul.mubr.bf16.gmra.mxu0 %v1458
    %v1607 = vpop.f32.mrf.mxu0
    %v1608 = vadd.f32 %v1491, %v1607
    %v1609 = vpop.f32.mrf.mxu0
    %v1610 = vpop.f32.mrf.mxu0
    %v1611 = vadd.f32 %v1491, %v1610
    %v1612 = vpop.f32.mrf.mxu0
    %1613 = vmatprep.mubr.bf16.mxu0 0
    %1614 = vmatmul.mubr.bf16.gmra.mxu0 %v1459
    %v1615 = vpop.f32.mrf.mxu0
    %v1616 = vadd.f32 %v1491, %v1615
    %v1617 = vpop.f32.mrf.mxu0
    %v1618 = vpop.f32.mrf.mxu0
    %v1619 = vadd.f32 %v1491, %v1618
    %v1620 = vpop.f32.mrf.mxu0
    %1621 = vmatprep.mubr.bf16.mxu0 0
    %1622 = vmatmul.mubr.bf16.gmra.mxu0 %v1460
    %v1623 = vpop.f32.mrf.mxu0
    %v1624 = vadd.f32 %v1491, %v1623
    %v1625 = vpop.f32.mrf.mxu0
    %v1626 = vpop.f32.mrf.mxu0
    %v1627 = vadd.f32 %v1491, %v1626
    %v1628 = vpop.f32.mrf.mxu0
    %1629 = vmatprep.mubr.bf16.mxu0 0
    %1630 = vmatmul.mubr.bf16.gmra.mxu0 %v1461
    %v1631 = vpop.f32.mrf.mxu0
    %v1632 = vadd.f32 %v1491, %v1631
    %v1633 = vpop.f32.mrf.mxu0
    %v1634 = vpop.f32.mrf.mxu0
    %v1635 = vadd.f32 %v1491, %v1634
    %v1636 = vpop.f32.mrf.mxu0
    %1637 = vmatprep.mubr.bf16.mxu0 0
    %1638 = vmatmul.mubr.bf16.gmra.mxu0 %v1462
    %v1639 = vpop.f32.mrf.mxu0
    %v1640 = vadd.f32 %v1491, %v1639
    %v1641 = vpop.f32.mrf.mxu0
    %v1642 = vpop.f32.mrf.mxu0
    %v1643 = vadd.f32 %v1491, %v1642
    %v1644 = vpop.f32.mrf.mxu0
    %1645 = vmatprep.mubr.bf16.mxu0 0
    %1646 = vmatmul.mubr.bf16.gmra.mxu0 %v1463
    %v1647 = vpop.f32.mrf.mxu0
    %v1648 = vadd.f32 %v1491, %v1647
    %v1649 = vpop.f32.mrf.mxu0
    %v1650 = vpop.f32.mrf.mxu0
    %v1651 = vadd.f32 %v1491, %v1650
    %v1652 = vpop.f32.mrf.mxu0
    %1653 = vmatprep.mubr.bf16.mxu0 0
    %1654 = vmatmul.mubr.bf16.gmra.mxu0 %v1464
    %v1655 = vpop.f32.mrf.mxu0
    %v1656 = vadd.f32 %v1491, %v1655
    %v1657 = vpop.f32.mrf.mxu0
    %v1658 = vpop.f32.mrf.mxu0
    %v1659 = vadd.f32 %v1491, %v1658
    %v1660 = vpop.f32.mrf.mxu0
    %1661 = vmatprep.mubr.bf16.mxu0 0
    %1662 = vmatmul.mubr.bf16.gmra.mxu0 %v1465
    %v1663 = vpop.f32.mrf.mxu0
    %v1664 = vadd.f32 %v1491, %v1663
    %v1665 = vpop.f32.mrf.mxu0
    %v1666 = vpop.f32.mrf.mxu0
    %v1667 = vadd.f32 %v1491, %v1666
    %v1668 = vpop.f32.mrf.mxu0
    %1669 = vmatprep.mubr.bf16.mxu0 0
    %1670 = vmatmul.mubr.bf16.gmra.mxu0 %v1466
    %v1671 = vpop.f32.mrf.mxu0
    %v1672 = vadd.f32 %v1491, %v1671
    %v1673 = vpop.f32.mrf.mxu0
    %v1674 = vpop.f32.mrf.mxu0
    %v1675 = vadd.f32 %v1491, %v1674
    %v1676 = vpop.f32.mrf.mxu0
    %1677 = vmatprep.mubr.bf16.mxu0 0
    %1678 = vmatmul.mubr.bf16.gmra.mxu0 %v1467
    %v1679 = vpop.f32.mrf.mxu0
    %v1680 = vadd.f32 %v1491, %v1679
    %v1681 = vpop.f32.mrf.mxu0
    %v1682 = vpop.f32.mrf.mxu0
    %v1683 = vadd.f32 %v1491, %v1682
    %v1684 = vpop.f32.mrf.mxu0
    %1685 = vmatprep.mubr.bf16.mxu0 0
    %1686 = vmatmul.mubr.bf16.gmra.mxu0 %v1468
    %v1687 = vpop.f32.mrf.mxu0
    %v1688 = vadd.f32 %v1491, %v1687
    %v1689 = vpop.f32.mrf.mxu0
    %v1690 = vpop.f32.mrf.mxu0
    %v1691 = vadd.f32 %v1491, %v1690
    %v1692 = vpop.f32.mrf.mxu0
    %1693 = vmatprep.mubr.bf16.mxu0 0
    %1694 = vmatmul.mubr.bf16.gmra.mxu0 %v1469
    %v1695 = vpop.f32.mrf.mxu0
    %v1696 = vadd.f32 %v1491, %v1695
    %v1697 = vpop.f32.mrf.mxu0
    %v1698 = vpop.f32.mrf.mxu0
    %v1699 = vadd.f32 %v1491, %v1698
    %v1700 = vpop.f32.mrf.mxu0
    %1701 = vdwg.mxu0
    %v1702 = vpack.c.bf16 %v1579, %v1576
    %v1703 = vpack.c.bf16 %v1587, %v1584
    %v1704 = vpack.c.bf16 %v1595, %v1592
    %v1705 = vpack.c.bf16 %v1603, %v1600
    %v1706 = vpack.c.bf16 %v1611, %v1608
    %v1707 = vpack.c.bf16 %v1619, %v1616
    %v1708 = vpack.c.bf16 %v1627, %v1624
    %v1709 = vpack.c.bf16 %v1635, %v1632
    %v1710 = vpack.c.bf16 %v1643, %v1640
    %v1711 = vpack.c.bf16 %v1651, %v1648
    %v1712 = vpack.c.bf16 %v1659, %v1656
    %v1713 = vpack.c.bf16 %v1667, %v1664
    %v1714 = vpack.c.bf16 %v1675, %v1672
    %v1715 = vpack.c.bf16 %v1683, %v1680
    %v1716 = vpack.c.bf16 %v1691, %v1688
    %v1717 = vpack.c.bf16 %v1699, %v1696
    %vm1718 = vcmp.gt.bf16.partialorder %v1702, 0
    %vm1719 = vcmp.gt.bf16.partialorder %v1703, 0
    %vm1720 = vcmp.gt.bf16.partialorder %v1704, 0
    %vm1721 = vcmp.gt.bf16.partialorder %v1705, 0
    %vm1722 = vcmp.gt.bf16.partialorder %v1706, 0
    %vm1723 = vcmp.gt.bf16.partialorder %v1707, 0
    %vm1724 = vcmp.gt.bf16.partialorder %v1708, 0
    %vm1725 = vcmp.gt.bf16.partialorder %v1709, 0
    %vm1726 = vcmp.gt.bf16.partialorder %v1710, 0
    %vm1727 = vcmp.gt.bf16.partialorder %v1711, 0
    %vm1728 = vcmp.gt.bf16.partialorder %v1712, 0
    %vm1729 = vcmp.gt.bf16.partialorder %v1713, 0
    %vm1730 = vcmp.gt.bf16.partialorder %v1714, 0
    %vm1731 = vcmp.gt.bf16.partialorder %v1715, 0
    %vm1732 = vcmp.gt.bf16.partialorder %v1716, 0
    %vm1733 = vcmp.gt.bf16.partialorder %v1717, 0
    %v1734 = vmul.bf16 %v1702, 1009007652
    %v1735 = vmul.bf16 %v1703, 1009007652
    %v1736 = vmul.bf16 %v1704, 1009007652
    %v1737 = vmul.bf16 %v1705, 1009007652
    %v1738 = vmul.bf16 %v1706, 1009007652
    %v1739 = vmul.bf16 %v1707, 1009007652
    %v1740 = vmul.bf16 %v1708, 1009007652
    %v1741 = vmul.bf16 %v1709, 1009007652
    %v1742 = vmul.bf16 %v1710, 1009007652
    %v1743 = vmul.bf16 %v1711, 1009007652
    %v1744 = vmul.bf16 %v1712, 1009007652
    %v1745 = vmul.bf16 %v1713, 1009007652
    %v1746 = vmul.bf16 %v1714, 1009007652
    %v1747 = vmul.bf16 %v1715, 1009007652
    %v1748 = vmul.bf16 %v1716, 1009007652
    %v1749 = vmul.bf16 %v1717, 1009007652
    %v1750 = vsel %vm1718, %v1702, %v1734
    %v1751 = vsel %vm1719, %v1703, %v1735
    %v1752 = vsel %vm1720, %v1704, %v1736
    %v1753 = vsel %vm1721, %v1705, %v1737
    %v1754 = vsel %vm1722, %v1706, %v1738
    %v1755 = vsel %vm1723, %v1707, %v1739
    %v1756 = vsel %vm1724, %v1708, %v1740
    %v1757 = vsel %vm1725, %v1709, %v1741
    %v1758 = vsel %vm1726, %v1710, %v1742
    %v1759 = vsel %vm1727, %v1711, %v1743
    %v1760 = vsel %vm1728, %v1712, %v1744
    %v1761 = vsel %vm1729, %v1713, %v1745
    %v1762 = vsel %vm1730, %v1714, %v1746
    %v1763 = vsel %vm1731, %v1715, %v1747
    %v1764 = vsel %vm1732, %v1716, %v1748
    %v1765 = vsel %vm1733, %v1717, %v1749
    %v1766 = vld [vmem:[%s11] sm:$0xff]
    %v1767 = vld [vmem:[%s11 + $0x8] sm:$0xff]
    %v1768 = vld [vmem:[%s11 + $0x10] sm:$0xff]
    %v1769 = vld [vmem:[%s11 + $0x18] sm:$0xff]
    %v1770 = vld [vmem:[%s11 + $0x20] sm:$0xff]
    %v1771 = vld [vmem:[%s11 + $0x28] sm:$0xff]
    %v1772 = vld [vmem:[%s11 + $0x30] sm:$0xff]
    %v1773 = vld [vmem:[%s11 + $0x38] sm:$0xff]
    %v1774 = vld [vmem:[%s11 + $0x40] sm:$0xff]
    %v1775 = vld [vmem:[%s11 + $0x48] sm:$0xff]
    %v1776 = vld [vmem:[%s11 + $0x50] sm:$0xff]
    %v1777 = vld [vmem:[%s11 + $0x58] sm:$0xff]
    %v1778 = vld [vmem:[%s11 + $0x60] sm:$0xff]
    %v1779 = vld [vmem:[%s11 + $0x68] sm:$0xff]
    %v1780 = vld [vmem:[%s11 + $0x70] sm:$0xff]
    %v1781 = vld [vmem:[%s11 + $0x78] sm:$0xff]
    %v1782 = vld [vmem:[%s12] sm:$0x3]
    %v1784 = vlaneseq
    %v1785 = vshrl.u32 %v1784, 7
    %v1786 = vsub.s32 0, %v1785
    %v1787 = vrot.slane %v1782, %v1786
    %v1788 = vlaneseq
    %v1789 = vshrl.u32 %v1788, 7
    %v1790 = vsub.s32 1, %v1789
    %v1791 = vrot.slane %v1782, %v1790
    %v1810 = vunpack.c.l.b16 %v1766
    %v1811 = vunpack.c.h.b16 %v1766
    %v1812 = vunpack.c.l.b16 %v1767
    %v1813 = vunpack.c.h.b16 %v1767
    %v1814 = vunpack.c.l.b16 %v1768
    %v1815 = vunpack.c.h.b16 %v1768
    %v1816 = vunpack.c.l.b16 %v1769
    %v1817 = vunpack.c.h.b16 %v1769
    %v1818 = vunpack.c.l.b16 %v1770
    %v1819 = vunpack.c.h.b16 %v1770
    %v1820 = vunpack.c.l.b16 %v1771
    %v1821 = vunpack.c.h.b16 %v1771
    %v1822 = vunpack.c.l.b16 %v1772
    %v1823 = vunpack.c.h.b16 %v1772
    %v1824 = vunpack.c.l.b16 %v1773
    %v1825 = vunpack.c.h.b16 %v1773
    %v1826 = vunpack.c.l.b16 %v1774
    %v1827 = vunpack.c.h.b16 %v1774
    %v1828 = vunpack.c.l.b16 %v1775
    %v1829 = vunpack.c.h.b16 %v1775
    %v1830 = vunpack.c.l.b16 %v1776
    %v1831 = vunpack.c.h.b16 %v1776
    %v1832 = vunpack.c.l.b16 %v1777
    %v1833 = vunpack.c.h.b16 %v1777
    %v1834 = vunpack.c.l.b16 %v1778
    %v1835 = vunpack.c.h.b16 %v1778
    %v1836 = vunpack.c.l.b16 %v1779
    %v1837 = vunpack.c.h.b16 %v1779
    %v1838 = vunpack.c.l.b16 %v1780
    %v1839 = vunpack.c.h.b16 %v1780
    %v1840 = vunpack.c.l.b16 %v1781
    %v1841 = vunpack.c.h.b16 %v1781
    %v1842 = vpack.c.b16 %v1812, %v1810
    %v1843 = vpack.c.b16 %v1813, %v1811
    %v1844 = vpack.c.b16 %v1816, %v1814
    %v1845 = vpack.c.b16 %v1817, %v1815
    %v1846 = vpack.c.b16 %v1820, %v1818
    %v1847 = vpack.c.b16 %v1821, %v1819
    %v1848 = vpack.c.b16 %v1824, %v1822
    %v1849 = vpack.c.b16 %v1825, %v1823
    %v1850 = vpack.c.b16 %v1828, %v1826
    %v1851 = vpack.c.b16 %v1829, %v1827
    %v1852 = vpack.c.b16 %v1832, %v1830
    %v1853 = vpack.c.b16 %v1833, %v1831
    %v1854 = vpack.c.b16 %v1836, %v1834
    %v1855 = vpack.c.b16 %v1837, %v1835
    %v1856 = vpack.c.b16 %v1840, %v1838
    %v1857 = vpack.c.b16 %v1841, %v1839
    %1874 = vmatprep.subr.bf16.mxu0 %v1857
    %1875 = vmatpush1.bf16.msra.mxu0 %v1856
    %1876 = vmatprep.subr.bf16.mxu0 %v1855
    %1877 = vmatpush1.bf16.msra.mxu0 %v1854
    %1878 = vmatprep.subr.bf16.mxu0 %v1853
    %1879 = vmatpush1.bf16.msra.mxu0 %v1852
    %1880 = vmatprep.subr.bf16.mxu0 %v1851
    %1881 = vmatpush1.bf16.msra.mxu0 %v1850
    %1882 = vmatprep.subr.bf16.mxu0 %v1849
    %1883 = vmatpush1.bf16.msra.mxu0 %v1848
    %1884 = vmatprep.subr.bf16.mxu0 %v1847
    %1885 = vmatpush1.bf16.msra.mxu0 %v1846
    %1886 = vmatprep.subr.bf16.mxu0 %v1845
    %1887 = vmatpush1.bf16.msra.mxu0 %v1844
    %1888 = vmatprep.subr.bf16.mxu0 %v1843
    %1889 = vmatpush1.bf16.msra.mxu0 %v1842
    %1890 = vmatprep.subr.bf16.mxu0 0
    %1891 = vmatpush2.bf16.msra.mxu0 0
    %1892 = vmatprep.subr.bf16.mxu0 0
    %1893 = vmatpush2.bf16.msra.mxu0 0
    %1894 = vmatprep.subr.bf16.mxu0 0
    %1895 = vmatpush2.bf16.msra.mxu0 0
    %1896 = vmatprep.subr.bf16.mxu0 0
    %1897 = vmatpush2.bf16.msra.mxu0 0
    %1898 = vmatprep.subr.bf16.mxu0 0
    %1899 = vmatpush2.bf16.msra.mxu0 0
    %1900 = vmatprep.subr.bf16.mxu0 0
    %1901 = vmatpush2.bf16.msra.mxu0 0
    %1902 = vmatprep.subr.bf16.mxu0 0
    %1903 = vmatpush2.bf16.msra.mxu0 0
    %1904 = vmatprep.subr.bf16.mxu0 0
    %1905 = vmatpush2.bf16.msra.mxu0 0
    %1906 = vmatprep.mubr.bf16.mxu0 0
    %1907 = vmatmul.mubr.bf16.gmra.mxu0 %v1750
    %v1908 = vpop.f32.mrf.mxu0
    %v1909 = vadd.f32 %v1787, %v1908
    %v1910 = vpop.f32.mrf.mxu0
    %v1911 = vadd.f32 %v1791, %v1910
    %v1912 = vpop.f32.mrf.mxu0
    %v1913 = vadd.f32 %v1787, %v1912
    %v1914 = vpop.f32.mrf.mxu0
    %v1915 = vadd.f32 %v1791, %v1914
    %1916 = vmatprep.mubr.bf16.mxu0 0
    %1917 = vmatmul.mubr.bf16.gmra.mxu0 %v1751
    %v1918 = vpop.f32.mrf.mxu0
    %v1919 = vadd.f32 %v1787, %v1918
    %v1920 = vpop.f32.mrf.mxu0
    %v1921 = vadd.f32 %v1791, %v1920
    %v1922 = vpop.f32.mrf.mxu0
    %v1923 = vadd.f32 %v1787, %v1922
    %v1924 = vpop.f32.mrf.mxu0
    %v1925 = vadd.f32 %v1791, %v1924
    %1926 = vmatprep.mubr.bf16.mxu0 0
    %1927 = vmatmul.mubr.bf16.gmra.mxu0 %v1752
    %v1928 = vpop.f32.mrf.mxu0
    %v1929 = vadd.f32 %v1787, %v1928
    %v1930 = vpop.f32.mrf.mxu0
    %v1931 = vadd.f32 %v1791, %v1930
    %v1932 = vpop.f32.mrf.mxu0
    %v1933 = vadd.f32 %v1787, %v1932
    %v1934 = vpop.f32.mrf.mxu0
    %v1935 = vadd.f32 %v1791, %v1934
    %1936 = vmatprep.mubr.bf16.mxu0 0
    %1937 = vmatmul.mubr.bf16.gmra.mxu0 %v1753
    %v1938 = vpop.f32.mrf.mxu0
    %v1939 = vadd.f32 %v1787, %v1938
    %v1940 = vpop.f32.mrf.mxu0
    %v1941 = vadd.f32 %v1791, %v1940
    %v1942 = vpop.f32.mrf.mxu0
    %v1943 = vadd.f32 %v1787, %v1942
    %v1944 = vpop.f32.mrf.mxu0
    %v1945 = vadd.f32 %v1791, %v1944
    %1946 = vmatprep.mubr.bf16.mxu0 0
    %1947 = vmatmul.mubr.bf16.gmra.mxu0 %v1754
    %v1948 = vpop.f32.mrf.mxu0
    %v1949 = vadd.f32 %v1787, %v1948
    %v1950 = vpop.f32.mrf.mxu0
    %v1951 = vadd.f32 %v1791, %v1950
    %v1952 = vpop.f32.mrf.mxu0
    %v1953 = vadd.f32 %v1787, %v1952
    %v1954 = vpop.f32.mrf.mxu0
    %v1955 = vadd.f32 %v1791, %v1954
    %1956 = vmatprep.mubr.bf16.mxu0 0
    %1957 = vmatmul.mubr.bf16.gmra.mxu0 %v1755
    %v1958 = vpop.f32.mrf.mxu0
    %v1959 = vadd.f32 %v1787, %v1958
    %v1960 = vpop.f32.mrf.mxu0
    %v1961 = vadd.f32 %v1791, %v1960
    %v1962 = vpop.f32.mrf.mxu0
    %v1963 = vadd.f32 %v1787, %v1962
    %v1964 = vpop.f32.mrf.mxu0
    %v1965 = vadd.f32 %v1791, %v1964
    %1966 = vmatprep.mubr.bf16.mxu0 0
    %1967 = vmatmul.mubr.bf16.gmra.mxu0 %v1756
    %v1968 = vpop.f32.mrf.mxu0
    %v1969 = vadd.f32 %v1787, %v1968
    %v1970 = vpop.f32.mrf.mxu0
    %v1971 = vadd.f32 %v1791, %v1970
    %v1972 = vpop.f32.mrf.mxu0
    %v1973 = vadd.f32 %v1787, %v1972
    %v1974 = vpop.f32.mrf.mxu0
    %v1975 = vadd.f32 %v1791, %v1974
    %1976 = vmatprep.mubr.bf16.mxu0 0
    %1977 = vmatmul.mubr.bf16.gmra.mxu0 %v1757
    %v1978 = vpop.f32.mrf.mxu0
    %v1979 = vadd.f32 %v1787, %v1978
    %v1980 = vpop.f32.mrf.mxu0
    %v1981 = vadd.f32 %v1791, %v1980
    %v1982 = vpop.f32.mrf.mxu0
    %v1983 = vadd.f32 %v1787, %v1982
    %v1984 = vpop.f32.mrf.mxu0
    %v1985 = vadd.f32 %v1791, %v1984
    %1986 = vmatprep.mubr.bf16.mxu0 0
    %1987 = vmatmul.mubr.bf16.gmra.mxu0 %v1758
    %v1988 = vpop.f32.mrf.mxu0
    %v1989 = vadd.f32 %v1787, %v1988
    %v1990 = vpop.f32.mrf.mxu0
    %v1991 = vadd.f32 %v1791, %v1990
    %v1992 = vpop.f32.mrf.mxu0
    %v1993 = vadd.f32 %v1787, %v1992
    %v1994 = vpop.f32.mrf.mxu0
    %v1995 = vadd.f32 %v1791, %v1994
    %1996 = vmatprep.mubr.bf16.mxu0 0
    %1997 = vmatmul.mubr.bf16.gmra.mxu0 %v1759
    %v1998 = vpop.f32.mrf.mxu0
    %v1999 = vadd.f32 %v1787, %v1998
    %v2000 = vpop.f32.mrf.mxu0
    %v2001 = vadd.f32 %v1791, %v2000
    %v2002 = vpop.f32.mrf.mxu0
    %v2003 = vadd.f32 %v1787, %v2002
    %v2004 = vpop.f32.mrf.mxu0
    %v2005 = vadd.f32 %v1791, %v2004
    %2006 = vmatprep.mubr.bf16.mxu0 0
    %2007 = vmatmul.mubr.bf16.gmra.mxu0 %v1760
    %v2008 = vpop.f32.mrf.mxu0
    %v2009 = vadd.f32 %v1787, %v2008
    %v2010 = vpop.f32.mrf.mxu0
    %v2011 = vadd.f32 %v1791, %v2010
    %v2012 = vpop.f32.mrf.mxu0
    %v2013 = vadd.f32 %v1787, %v2012
    %v2014 = vpop.f32.mrf.mxu0
    %v2015 = vadd.f32 %v1791, %v2014
    %2016 = vmatprep.mubr.bf16.mxu0 0
    %2017 = vmatmul.mubr.bf16.gmra.mxu0 %v1761
    %v2018 = vpop.f32.mrf.mxu0
    %v2019 = vadd.f32 %v1787, %v2018
    %v2020 = vpop.f32.mrf.mxu0
    %v2021 = vadd.f32 %v1791, %v2020
    %v2022 = vpop.f32.mrf.mxu0
    %v2023 = vadd.f32 %v1787, %v2022
    %v2024 = vpop.f32.mrf.mxu0
    %v2025 = vadd.f32 %v1791, %v2024
    %2026 = vmatprep.mubr.bf16.mxu0 0
    %2027 = vmatmul.mubr.bf16.gmra.mxu0 %v1762
    %v2028 = vpop.f32.mrf.mxu0
    %v2029 = vadd.f32 %v1787, %v2028
    %v2030 = vpop.f32.mrf.mxu0
    %v2031 = vadd.f32 %v1791, %v2030
    %v2032 = vpop.f32.mrf.mxu0
    %v2033 = vadd.f32 %v1787, %v2032
    %v2034 = vpop.f32.mrf.mxu0
    %v2035 = vadd.f32 %v1791, %v2034
    %2036 = vmatprep.mubr.bf16.mxu0 0
    %2037 = vmatmul.mubr.bf16.gmra.mxu0 %v1763
    %v2038 = vpop.f32.mrf.mxu0
    %v2039 = vadd.f32 %v1787, %v2038
    %v2040 = vpop.f32.mrf.mxu0
    %v2041 = vadd.f32 %v1791, %v2040
    %v2042 = vpop.f32.mrf.mxu0
    %v2043 = vadd.f32 %v1787, %v2042
    %v2044 = vpop.f32.mrf.mxu0
    %v2045 = vadd.f32 %v1791, %v2044
    %2046 = vmatprep.mubr.bf16.mxu0 0
    %2047 = vmatmul.mubr.bf16.gmra.mxu0 %v1764
    %v2048 = vpop.f32.mrf.mxu0
    %v2049 = vadd.f32 %v1787, %v2048
    %v2050 = vpop.f32.mrf.mxu0
    %v2051 = vadd.f32 %v1791, %v2050
    %v2052 = vpop.f32.mrf.mxu0
    %v2053 = vadd.f32 %v1787, %v2052
    %v2054 = vpop.f32.mrf.mxu0
    %v2055 = vadd.f32 %v1791, %v2054
    %2056 = vmatprep.mubr.bf16.mxu0 0
    %2057 = vmatmul.mubr.bf16.gmra.mxu0 %v1765
    %v2058 = vpop.f32.mrf.mxu0
    %v2059 = vadd.f32 %v1787, %v2058
    %v2060 = vpop.f32.mrf.mxu0
    %v2061 = vadd.f32 %v1791, %v2060
    %v2062 = vpop.f32.mrf.mxu0
    %v2063 = vadd.f32 %v1787, %v2062
    %v2064 = vpop.f32.mrf.mxu0
    %v2065 = vadd.f32 %v1791, %v2064
    %2066 = vdwg.mxu0
    %v2067 = vpack.c.bf16 %v1913, %v1909
    %v2068 = vpack.c.bf16 %v1915, %v1911
    %v2069 = vpack.c.bf16 %v1923, %v1919
    %v2070 = vpack.c.bf16 %v1925, %v1921
    %v2071 = vpack.c.bf16 %v1933, %v1929
    %v2072 = vpack.c.bf16 %v1935, %v1931
    %v2073 = vpack.c.bf16 %v1943, %v1939
    %v2074 = vpack.c.bf16 %v1945, %v1941
    %v2075 = vpack.c.bf16 %v1953, %v1949
    %v2076 = vpack.c.bf16 %v1955, %v1951
    %v2077 = vpack.c.bf16 %v1963, %v1959
    %v2078 = vpack.c.bf16 %v1965, %v1961
    %v2079 = vpack.c.bf16 %v1973, %v1969
    %v2080 = vpack.c.bf16 %v1975, %v1971
    %v2081 = vpack.c.bf16 %v1983, %v1979
    %v2082 = vpack.c.bf16 %v1985, %v1981
    %v2083 = vpack.c.bf16 %v1993, %v1989
    %v2084 = vpack.c.bf16 %v1995, %v1991
    %v2085 = vpack.c.bf16 %v2003, %v1999
    %v2086 = vpack.c.bf16 %v2005, %v2001
    %v2087 = vpack.c.bf16 %v2013, %v2009
    %v2088 = vpack.c.bf16 %v2015, %v2011
    %v2089 = vpack.c.bf16 %v2023, %v2019
    %v2090 = vpack.c.bf16 %v2025, %v2021
    %v2091 = vpack.c.bf16 %v2033, %v2029
    %v2092 = vpack.c.bf16 %v2035, %v2031
    %v2093 = vpack.c.bf16 %v2043, %v2039
    %v2094 = vpack.c.bf16 %v2045, %v2041
    %v2095 = vpack.c.bf16 %v2053, %v2049
    %v2096 = vpack.c.bf16 %v2055, %v2051
    %v2097 = vpack.c.bf16 %v2063, %v2059
    %v2098 = vpack.c.bf16 %v2065, %v2061
    %vm2099 = vcmp.gt.bf16.partialorder %v2067, 0
    %vm2100 = vcmp.gt.bf16.partialorder %v2068, 0
    %vm2101 = vcmp.gt.bf16.partialorder %v2069, 0
    %vm2102 = vcmp.gt.bf16.partialorder %v2070, 0
    %vm2103 = vcmp.gt.bf16.partialorder %v2071, 0
    %vm2104 = vcmp.gt.bf16.partialorder %v2072, 0
    %vm2105 = vcmp.gt.bf16.partialorder %v2073, 0
    %vm2106 = vcmp.gt.bf16.partialorder %v2074, 0
    %vm2107 = vcmp.gt.bf16.partialorder %v2075, 0
    %vm2108 = vcmp.gt.bf16.partialorder %v2076, 0
    %vm2109 = vcmp.gt.bf16.partialorder %v2077, 0
    %vm2110 = vcmp.gt.bf16.partialorder %v2078, 0
    %vm2111 = vcmp.gt.bf16.partialorder %v2079, 0
    %vm2112 = vcmp.gt.bf16.partialorder %v2080, 0
    %vm2113 = vcmp.gt.bf16.partialorder %v2081, 0
    %vm2114 = vcmp.gt.bf16.partialorder %v2082, 0
    %vm2115 = vcmp.gt.bf16.partialorder %v2083, 0
    %vm2116 = vcmp.gt.bf16.partialorder %v2084, 0
    %vm2117 = vcmp.gt.bf16.partialorder %v2085, 0
    %vm2118 = vcmp.gt.bf16.partialorder %v2086, 0
    %vm2119 = vcmp.gt.bf16.partialorder %v2087, 0
    %vm2120 = vcmp.gt.bf16.partialorder %v2088, 0
    %vm2121 = vcmp.gt.bf16.partialorder %v2089, 0
    %vm2122 = vcmp.gt.bf16.partialorder %v2090, 0
    %vm2123 = vcmp.gt.bf16.partialorder %v2091, 0
    %vm2124 = vcmp.gt.bf16.partialorder %v2092, 0
    %vm2125 = vcmp.gt.bf16.partialorder %v2093, 0
    %vm2126 = vcmp.gt.bf16.partialorder %v2094, 0
    %vm2127 = vcmp.gt.bf16.partialorder %v2095, 0
    %vm2128 = vcmp.gt.bf16.partialorder %v2096, 0
    %vm2129 = vcmp.gt.bf16.partialorder %v2097, 0
    %vm2130 = vcmp.gt.bf16.partialorder %v2098, 0
    %v2131 = vmul.bf16 %v2067, 1009007652
    %v2132 = vmul.bf16 %v2068, 1009007652
    %v2133 = vmul.bf16 %v2069, 1009007652
    %v2134 = vmul.bf16 %v2070, 1009007652
    %v2135 = vmul.bf16 %v2071, 1009007652
    %v2136 = vmul.bf16 %v2072, 1009007652
    %v2137 = vmul.bf16 %v2073, 1009007652
    %v2138 = vmul.bf16 %v2074, 1009007652
    %v2139 = vmul.bf16 %v2075, 1009007652
    %v2140 = vmul.bf16 %v2076, 1009007652
    %v2141 = vmul.bf16 %v2077, 1009007652
    %v2142 = vmul.bf16 %v2078, 1009007652
    %v2143 = vmul.bf16 %v2079, 1009007652
    %v2144 = vmul.bf16 %v2080, 1009007652
    %v2145 = vmul.bf16 %v2081, 1009007652
    %v2146 = vmul.bf16 %v2082, 1009007652
    %v2147 = vmul.bf16 %v2083, 1009007652
    %v2148 = vmul.bf16 %v2084, 1009007652
    %v2149 = vmul.bf16 %v2085, 1009007652
    %v2150 = vmul.bf16 %v2086, 1009007652
    %v2151 = vmul.bf16 %v2087, 1009007652
    %v2152 = vmul.bf16 %v2088, 1009007652
    %v2153 = vmul.bf16 %v2089, 1009007652
    %v2154 = vmul.bf16 %v2090, 1009007652
    %v2155 = vmul.bf16 %v2091, 1009007652
    %v2156 = vmul.bf16 %v2092, 1009007652
    %v2157 = vmul.bf16 %v2093, 1009007652
    %v2158 = vmul.bf16 %v2094, 1009007652
    %v2159 = vmul.bf16 %v2095, 1009007652
    %v2160 = vmul.bf16 %v2096, 1009007652
    %v2161 = vmul.bf16 %v2097, 1009007652
    %v2162 = vmul.bf16 %v2098, 1009007652
    %v2163 = vsel %vm2099, %v2067, %v2131
    %v2164 = vsel %vm2100, %v2068, %v2132
    %v2165 = vsel %vm2101, %v2069, %v2133
    %v2166 = vsel %vm2102, %v2070, %v2134
    %v2167 = vsel %vm2103, %v2071, %v2135
    %v2168 = vsel %vm2104, %v2072, %v2136
    %v2169 = vsel %vm2105, %v2073, %v2137
    %v2170 = vsel %vm2106, %v2074, %v2138
    %v2171 = vsel %vm2107, %v2075, %v2139
    %v2172 = vsel %vm2108, %v2076, %v2140
    %v2173 = vsel %vm2109, %v2077, %v2141
    %v2174 = vsel %vm2110, %v2078, %v2142
    %v2175 = vsel %vm2111, %v2079, %v2143
    %v2176 = vsel %vm2112, %v2080, %v2144
    %v2177 = vsel %vm2113, %v2081, %v2145
    %v2178 = vsel %vm2114, %v2082, %v2146
    %v2179 = vsel %vm2115, %v2083, %v2147
    %v2180 = vsel %vm2116, %v2084, %v2148
    %v2181 = vsel %vm2117, %v2085, %v2149
    %v2182 = vsel %vm2118, %v2086, %v2150
    %v2183 = vsel %vm2119, %v2087, %v2151
    %v2184 = vsel %vm2120, %v2088, %v2152
    %v2185 = vsel %vm2121, %v2089, %v2153
    %v2186 = vsel %vm2122, %v2090, %v2154
    %v2187 = vsel %vm2123, %v2091, %v2155
    %v2188 = vsel %vm2124, %v2092, %v2156
    %v2189 = vsel %vm2125, %v2093, %v2157
    %v2190 = vsel %vm2126, %v2094, %v2158
    %v2191 = vsel %vm2127, %v2095, %v2159
    %v2192 = vsel %vm2128, %v2096, %v2160
    %v2193 = vsel %vm2129, %v2097, %v2161
    %v2194 = vsel %vm2130, %v2098, %v2162
    %v2195 = vld [vmem:[%s13] sm:$0xf]
    %v2196 = vld [vmem:[%s13 + $0x4] sm:$0xf]
    %v2197 = vld [vmem:[%s13 + $0x8] sm:$0xf]
    %v2198 = vld [vmem:[%s13 + $0xc] sm:$0xf]
    %v2199 = vld [vmem:[%s13 + $0x10] sm:$0xf]
    %v2200 = vld [vmem:[%s13 + $0x14] sm:$0xf]
    %v2201 = vld [vmem:[%s13 + $0x18] sm:$0xf]
    %v2202 = vld [vmem:[%s13 + $0x1c] sm:$0xf]
    %v2203 = vld [vmem:[%s13 + $0x20] sm:$0xf]
    %v2204 = vld [vmem:[%s13 + $0x24] sm:$0xf]
    %v2205 = vld [vmem:[%s13 + $0x28] sm:$0xf]
    %v2206 = vld [vmem:[%s13 + $0x2c] sm:$0xf]
    %v2207 = vld [vmem:[%s13 + $0x30] sm:$0xf]
    %v2208 = vld [vmem:[%s13 + $0x34] sm:$0xf]
    %v2209 = vld [vmem:[%s13 + $0x38] sm:$0xf]
    %v2210 = vld [vmem:[%s13 + $0x3c] sm:$0xf]
    %v2211 = vld [vmem:[%s13 + $0x40] sm:$0xf]
    %v2212 = vld [vmem:[%s13 + $0x44] sm:$0xf]
    %v2213 = vld [vmem:[%s13 + $0x48] sm:$0xf]
    %v2214 = vld [vmem:[%s13 + $0x4c] sm:$0xf]
    %v2215 = vld [vmem:[%s13 + $0x50] sm:$0xf]
    %v2216 = vld [vmem:[%s13 + $0x54] sm:$0xf]
    %v2217 = vld [vmem:[%s13 + $0x58] sm:$0xf]
    %v2218 = vld [vmem:[%s13 + $0x5c] sm:$0xf]
    %v2219 = vld [vmem:[%s13 + $0x60] sm:$0xf]
    %v2220 = vld [vmem:[%s13 + $0x64] sm:$0xf]
    %v2221 = vld [vmem:[%s13 + $0x68] sm:$0xf]
    %v2222 = vld [vmem:[%s13 + $0x6c] sm:$0xf]
    %v2223 = vld [vmem:[%s13 + $0x70] sm:$0xf]
    %v2224 = vld [vmem:[%s13 + $0x74] sm:$0xf]
    %v2225 = vld [vmem:[%s13 + $0x78] sm:$0xf]
    %v2226 = vld [vmem:[%s13 + $0x7c] sm:$0xf]
    %v2227 = vld [vmem:[%s14] sm:$0x1]
    %v2229 = vlaneseq
    %v2230 = vshrl.u32 %v2229, 7
    %v2231 = vsub.s32 0, %v2230
    %v2232 = vrot.slane %v2227, %v2231
    %v2266 = vunpack.c.l.b16 %v2195
    %v2267 = vunpack.c.l.b16 %v2196
    %v2268 = vunpack.c.l.b16 %v2197
    %v2269 = vunpack.c.l.b16 %v2198
    %v2270 = vunpack.c.l.b16 %v2199
    %v2271 = vunpack.c.l.b16 %v2200
    %v2272 = vunpack.c.l.b16 %v2201
    %v2273 = vunpack.c.l.b16 %v2202
    %v2274 = vunpack.c.l.b16 %v2203
    %v2275 = vunpack.c.l.b16 %v2204
    %v2276 = vunpack.c.l.b16 %v2205
    %v2277 = vunpack.c.l.b16 %v2206
    %v2278 = vunpack.c.l.b16 %v2207
    %v2279 = vunpack.c.l.b16 %v2208
    %v2280 = vunpack.c.l.b16 %v2209
    %v2281 = vunpack.c.l.b16 %v2210
    %v2282 = vunpack.c.l.b16 %v2211
    %v2283 = vunpack.c.l.b16 %v2212
    %v2284 = vunpack.c.l.b16 %v2213
    %v2285 = vunpack.c.l.b16 %v2214
    %v2286 = vunpack.c.l.b16 %v2215
    %v2287 = vunpack.c.l.b16 %v2216
    %v2288 = vunpack.c.l.b16 %v2217
    %v2289 = vunpack.c.l.b16 %v2218
    %v2290 = vunpack.c.l.b16 %v2219
    %v2291 = vunpack.c.l.b16 %v2220
    %v2292 = vunpack.c.l.b16 %v2221
    %v2293 = vunpack.c.l.b16 %v2222
    %v2294 = vunpack.c.l.b16 %v2223
    %v2295 = vunpack.c.l.b16 %v2224
    %v2296 = vunpack.c.l.b16 %v2225
    %v2297 = vunpack.c.l.b16 %v2226
    %v2298 = vpack.c.b16 %v2267, %v2266
    %v2299 = vpack.c.b16 %v2269, %v2268
    %v2300 = vpack.c.b16 %v2271, %v2270
    %v2301 = vpack.c.b16 %v2273, %v2272
    %v2302 = vpack.c.b16 %v2275, %v2274
    %v2303 = vpack.c.b16 %v2277, %v2276
    %v2304 = vpack.c.b16 %v2279, %v2278
    %v2305 = vpack.c.b16 %v2281, %v2280
    %v2306 = vpack.c.b16 %v2283, %v2282
    %v2307 = vpack.c.b16 %v2285, %v2284
    %v2308 = vpack.c.b16 %v2287, %v2286
    %v2309 = vpack.c.b16 %v2289, %v2288
    %v2310 = vpack.c.b16 %v2291, %v2290
    %v2311 = vpack.c.b16 %v2293, %v2292
    %v2312 = vpack.c.b16 %v2295, %v2294
    %v2313 = vpack.c.b16 %v2297, %v2296
    %2330 = vmatprep.subr.bf16.mxu0 0
    %2331 = vmatpush1.bf16.msra.mxu0 %v2305
    %2332 = vmatprep.subr.bf16.mxu0 0
    %2333 = vmatpush1.bf16.msra.mxu0 %v2304
    %2334 = vmatprep.subr.bf16.mxu0 0
    %2335 = vmatpush1.bf16.msra.mxu0 %v2303
    %2336 = vmatprep.subr.bf16.mxu0 0
    %2337 = vmatpush1.bf16.msra.mxu0 %v2302
    %2338 = vmatprep.subr.bf16.mxu0 0
    %2339 = vmatpush1.bf16.msra.mxu0 %v2301
    %2340 = vmatprep.subr.bf16.mxu0 0
    %2341 = vmatpush1.bf16.msra.mxu0 %v2300
    %2342 = vmatprep.subr.bf16.mxu0 0
    %2343 = vmatpush1.bf16.msra.mxu0 %v2299
    %2344 = vmatprep.subr.bf16.mxu0 0
    %2345 = vmatpush1.bf16.msra.mxu0 %v2298
    %2346 = vmatprep.subr.bf16.mxu0 0
    %2347 = vmatpush2.bf16.msra.mxu0 %v2313
    %2348 = vmatprep.subr.bf16.mxu0 0
    %2349 = vmatpush2.bf16.msra.mxu0 %v2312
    %2350 = vmatprep.subr.bf16.mxu0 0
    %2351 = vmatpush2.bf16.msra.mxu0 %v2311
    %2352 = vmatprep.subr.bf16.mxu0 0
    %2353 = vmatpush2.bf16.msra.mxu0 %v2310
    %2354 = vmatprep.subr.bf16.mxu0 0
    %2355 = vmatpush2.bf16.msra.mxu0 %v2309
    %2356 = vmatprep.subr.bf16.mxu0 0
    %2357 = vmatpush2.bf16.msra.mxu0 %v2308
    %2358 = vmatprep.subr.bf16.mxu0 0
    %2359 = vmatpush2.bf16.msra.mxu0 %v2307
    %2360 = vmatprep.subr.bf16.mxu0 0
    %2361 = vmatpush2.bf16.msra.mxu0 %v2306
    %2362 = vmatprep.mubr.bf16.mxu0 %v2164
    %2363 = vmatmul.mubr.bf16.gmra.mxu0 %v2163
    %v2364 = vpop.f32.mrf.mxu0
    %v2365 = vadd.f32 %v2232, %v2364
    %v2366 = vpop.f32.mrf.mxu0
    %v2367 = vpop.f32.mrf.mxu0
    %v2368 = vadd.f32 %v2232, %v2367
    %v2369 = vpop.f32.mrf.mxu0
    %2370 = vmatprep.mubr.bf16.mxu0 %v2166
    %2371 = vmatmul.mubr.bf16.gmra.mxu0 %v2165
    %v2372 = vpop.f32.mrf.mxu0
    %v2373 = vadd.f32 %v2232, %v2372
    %v2374 = vpop.f32.mrf.mxu0
    %v2375 = vpop.f32.mrf.mxu0
    %v2376 = vadd.f32 %v2232, %v2375
    %v2377 = vpop.f32.mrf.mxu0
    %2378 = vmatprep.mubr.bf16.mxu0 %v2168
    %2379 = vmatmul.mubr.bf16.gmra.mxu0 %v2167
    %v2380 = vpop.f32.mrf.mxu0
    %v2381 = vadd.f32 %v2232, %v2380
    %v2382 = vpop.f32.mrf.mxu0
    %v2383 = vpop.f32.mrf.mxu0
    %v2384 = vadd.f32 %v2232, %v2383
    %v2385 = vpop.f32.mrf.mxu0
    %2386 = vmatprep.mubr.bf16.mxu0 %v2170
    %2387 = vmatmul.mubr.bf16.gmra.mxu0 %v2169
    %v2388 = vpop.f32.mrf.mxu0
    %v2389 = vadd.f32 %v2232, %v2388
    %v2390 = vpop.f32.mrf.mxu0
    %v2391 = vpop.f32.mrf.mxu0
    %v2392 = vadd.f32 %v2232, %v2391
    %v2393 = vpop.f32.mrf.mxu0
    %2394 = vmatprep.mubr.bf16.mxu0 %v2172
    %2395 = vmatmul.mubr.bf16.gmra.mxu0 %v2171
    %v2396 = vpop.f32.mrf.mxu0
    %v2397 = vadd.f32 %v2232, %v2396
    %v2398 = vpop.f32.mrf.mxu0
    %v2399 = vpop.f32.mrf.mxu0
    %v2400 = vadd.f32 %v2232, %v2399
    %v2401 = vpop.f32.mrf.mxu0
    %2402 = vmatprep.mubr.bf16.mxu0 %v2174
    %2403 = vmatmul.mubr.bf16.gmra.mxu0 %v2173
    %v2404 = vpop.f32.mrf.mxu0
    %v2405 = vadd.f32 %v2232, %v2404
    %v2406 = vpop.f32.mrf.mxu0
    %v2407 = vpop.f32.mrf.mxu0
    %v2408 = vadd.f32 %v2232, %v2407
    %v2409 = vpop.f32.mrf.mxu0
    %2410 = vmatprep.mubr.bf16.mxu0 %v2176
    %2411 = vmatmul.mubr.bf16.gmra.mxu0 %v2175
    %v2412 = vpop.f32.mrf.mxu0
    %v2413 = vadd.f32 %v2232, %v2412
    %v2414 = vpop.f32.mrf.mxu0
    %v2415 = vpop.f32.mrf.mxu0
    %v2416 = vadd.f32 %v2232, %v2415
    %v2417 = vpop.f32.mrf.mxu0
    %2418 = vmatprep.mubr.bf16.mxu0 %v2178
    %2419 = vmatmul.mubr.bf16.gmra.mxu0 %v2177
    %v2420 = vpop.f32.mrf.mxu0
    %v2421 = vadd.f32 %v2232, %v2420
    %v2422 = vpop.f32.mrf.mxu0
    %v2423 = vpop.f32.mrf.mxu0
    %v2424 = vadd.f32 %v2232, %v2423
    %v2425 = vpop.f32.mrf.mxu0
    %2426 = vmatprep.mubr.bf16.mxu0 %v2180
    %2427 = vmatmul.mubr.bf16.gmra.mxu0 %v2179
    %v2428 = vpop.f32.mrf.mxu0
    %v2429 = vadd.f32 %v2232, %v2428
    %v2430 = vpop.f32.mrf.mxu0
    %v2431 = vpop.f32.mrf.mxu0
    %v2432 = vadd.f32 %v2232, %v2431
    %v2433 = vpop.f32.mrf.mxu0
    %2434 = vmatprep.mubr.bf16.mxu0 %v2182
    %2435 = vmatmul.mubr.bf16.gmra.mxu0 %v2181
    %v2436 = vpop.f32.mrf.mxu0
    %v2437 = vadd.f32 %v2232, %v2436
    %v2438 = vpop.f32.mrf.mxu0
    %v2439 = vpop.f32.mrf.mxu0
    %v2440 = vadd.f32 %v2232, %v2439
    %v2441 = vpop.f32.mrf.mxu0
    %2442 = vmatprep.mubr.bf16.mxu0 %v2184
    %2443 = vmatmul.mubr.bf16.gmra.mxu0 %v2183
    %v2444 = vpop.f32.mrf.mxu0
    %v2445 = vadd.f32 %v2232, %v2444
    %v2446 = vpop.f32.mrf.mxu0
    %v2447 = vpop.f32.mrf.mxu0
    %v2448 = vadd.f32 %v2232, %v2447
    %v2449 = vpop.f32.mrf.mxu0
    %2450 = vmatprep.mubr.bf16.mxu0 %v2186
    %2451 = vmatmul.mubr.bf16.gmra.mxu0 %v2185
    %v2452 = vpop.f32.mrf.mxu0
    %v2453 = vadd.f32 %v2232, %v2452
    %v2454 = vpop.f32.mrf.mxu0
    %v2455 = vpop.f32.mrf.mxu0
    %v2456 = vadd.f32 %v2232, %v2455
    %v2457 = vpop.f32.mrf.mxu0
    %2458 = vmatprep.mubr.bf16.mxu0 %v2188
    %2459 = vmatmul.mubr.bf16.gmra.mxu0 %v2187
    %v2460 = vpop.f32.mrf.mxu0
    %v2461 = vadd.f32 %v2232, %v2460
    %v2462 = vpop.f32.mrf.mxu0
    %v2463 = vpop.f32.mrf.mxu0
    %v2464 = vadd.f32 %v2232, %v2463
    %v2465 = vpop.f32.mrf.mxu0
    %2466 = vmatprep.mubr.bf16.mxu0 %v2190
    %2467 = vmatmul.mubr.bf16.gmra.mxu0 %v2189
    %v2468 = vpop.f32.mrf.mxu0
    %v2469 = vadd.f32 %v2232, %v2468
    %v2470 = vpop.f32.mrf.mxu0
    %v2471 = vpop.f32.mrf.mxu0
    %v2472 = vadd.f32 %v2232, %v2471
    %v2473 = vpop.f32.mrf.mxu0
    %2474 = vmatprep.mubr.bf16.mxu0 %v2192
    %2475 = vmatmul.mubr.bf16.gmra.mxu0 %v2191
    %v2476 = vpop.f32.mrf.mxu0
    %v2477 = vadd.f32 %v2232, %v2476
    %v2478 = vpop.f32.mrf.mxu0
    %v2479 = vpop.f32.mrf.mxu0
    %v2480 = vadd.f32 %v2232, %v2479
    %v2481 = vpop.f32.mrf.mxu0
    %2482 = vmatprep.mubr.bf16.mxu0 %v2194
    %2483 = vmatmul.mubr.bf16.gmra.mxu0 %v2193
    %v2484 = vpop.f32.mrf.mxu0
    %v2485 = vadd.f32 %v2232, %v2484
    %v2486 = vpop.f32.mrf.mxu0
    %v2487 = vpop.f32.mrf.mxu0
    %v2488 = vadd.f32 %v2232, %v2487
    %v2489 = vpop.f32.mrf.mxu0
    %2490 = vdwg.mxu0
    %2491 = vst.msk [vmem:[%s15] sm:$0xff] %vm148, %v2365
    %2492 = vst.msk [vmem:[%s15 + $0x8] sm:$0xff] %vm148, %v2368
    %2493 = vst.msk [vmem:[%s15 + $0x10] sm:$0xff] %vm148, %v2373
    %2494 = vst.msk [vmem:[%s15 + $0x18] sm:$0xff] %vm148, %v2376
    %2495 = vst.msk [vmem:[%s15 + $0x20] sm:$0xff] %vm148, %v2381
    %2496 = vst.msk [vmem:[%s15 + $0x28] sm:$0xff] %vm148, %v2384
    %2497 = vst.msk [vmem:[%s15 + $0x30] sm:$0xff] %vm148, %v2389
    %2498 = vst.msk [vmem:[%s15 + $0x38] sm:$0xff] %vm148, %v2392
    %2499 = vst.msk [vmem:[%s15 + $0x40] sm:$0xff] %vm148, %v2397
    %2500 = vst.msk [vmem:[%s15 + $0x48] sm:$0xff] %vm148, %v2400
    %2501 = vst.msk [vmem:[%s15 + $0x50] sm:$0xff] %vm148, %v2405
    %2502 = vst.msk [vmem:[%s15 + $0x58] sm:$0xff] %vm148, %v2408
    %2503 = vst.msk [vmem:[%s15 + $0x60] sm:$0xff] %vm148, %v2413
    %2504 = vst.msk [vmem:[%s15 + $0x68] sm:$0xff] %vm148, %v2416
    %2505 = vst.msk [vmem:[%s15 + $0x70] sm:$0xff] %vm148, %v2421
    %2506 = vst.msk [vmem:[%s15 + $0x78] sm:$0xff] %vm148, %v2424
    %2507 = vst.msk [vmem:[%s15 + $0x80] sm:$0xff] %vm148, %v2429
    %2508 = vst.msk [vmem:[%s15 + $0x88] sm:$0xff] %vm148, %v2432
    %2509 = vst.msk [vmem:[%s15 + $0x90] sm:$0xff] %vm148, %v2437
    %2510 = vst.msk [vmem:[%s15 + $0x98] sm:$0xff] %vm148, %v2440
    %2511 = vst.msk [vmem:[%s15 + $0xa0] sm:$0xff] %vm148, %v2445
    %2512 = vst.msk [vmem:[%s15 + $0xa8] sm:$0xff] %vm148, %v2448
    %2513 = vst.msk [vmem:[%s15 + $0xb0] sm:$0xff] %vm148, %v2453
    %2514 = vst.msk [vmem:[%s15 + $0xb8] sm:$0xff] %vm148, %v2456
    %2515 = vst.msk [vmem:[%s15 + $0xc0] sm:$0xff] %vm148, %v2461
    %2516 = vst.msk [vmem:[%s15 + $0xc8] sm:$0xff] %vm148, %v2464
    %2517 = vst.msk [vmem:[%s15 + $0xd0] sm:$0xff] %vm148, %v2469
    %2518 = vst.msk [vmem:[%s15 + $0xd8] sm:$0xff] %vm148, %v2472
    %2519 = vst.msk [vmem:[%s15 + $0xe0] sm:$0xff] %vm148, %v2477
    %2520 = vst.msk [vmem:[%s15 + $0xe8] sm:$0xff] %vm148, %v2480
    %2521 = vst.msk [vmem:[%s15 + $0xf0] sm:$0xff] %vm148, %v2485
    %2522 = vst.msk [vmem:[%s15 + $0xf8] sm:$0xff] %vm148, %v2488
    // Predicated region
    $region66: #{_ae_forward_impl.1} parent=1 // pred_check
      _
    $region67: #{_ae_forward_impl.1} parent=1 // pred_check_branch
      %2524 = sbr.rel (0) target = $region69
    $region68: #{_ae_forward_impl.1} parent=1 // pred_region
      _
    $region69: #{_ae_forward_impl.1} parent=1 // pred_fallthru
      _
    // Predicated region
    $region70: #{_ae_forward_impl.1} parent=1 // pred_check
      _
    $region71: #{_ae_forward_impl.1} parent=1 // pred_check_branch
      %2526 = sbr.rel (0) target = $region73
    $region72: #{_ae_forward_impl.1} parent=1 // pred_region
      _
    $region73: #{_ae_forward_impl.1} parent=1 // pred_fallthru
      _
    %2527 = vsyncpa [#allocation3], 1

</llo_original>
